<compile_context>
chip_gen: v7x
topology: tpu7x:2x2x1
jax: 0.10.0
libtpu: 0.0.40
codegen_flags: <defaults>
</compile_context>

<pallas_src>
import functools
import math

import jax
import jax.numpy as jnp
from jax.experimental import pallas as pl
from jax.experimental.pallas import tpu as pltpu


def _round_up(a: int, b: int) -> int:
    return (a + b - 1) // b * b


# --------------------------------------------------------------------------
# Kernel A: whole d_ff in one chunk.  Weights/biases have constant index_maps
# so they are DMA'd into VMEM once and stay resident; no accumulator scratch.
# --------------------------------------------------------------------------
def _ffn_kernel_resident(x_ref, w1_ref, b1_ref, w2_ref, b2_ref, o_ref):
    # x_ref: (tr, C)  w1_ref: (C, H)  b1_ref: (1, H)  w2_ref: (H, C)
    # b2_ref: (1, C)  o_ref: (tr, C)
    h = jnp.dot(x_ref[...], w1_ref[...], preferred_element_type=jnp.float32)
    h = jnp.maximum(h + b1_ref[...], 0.0)                     # bias + ReLU in f32
    y = jnp.dot(h.astype(w2_ref.dtype), w2_ref[...],
                preferred_element_type=jnp.float32)
    o_ref[...] = (y + b2_ref[...]).astype(o_ref.dtype)


# --------------------------------------------------------------------------
# Kernel B: d_ff tiled as a (last) reduction grid axis with an f32 accumulator.
# Only used when d_ff > tile_h (not the case for DETR's d_model=256).
# --------------------------------------------------------------------------
def _ffn_kernel_accum(x_ref, w1_ref, b1_ref, w2_ref, b2_ref, o_ref, acc_ref):
    k = pl.program_id(1)

    @pl.when(k == 0)
    def _init():
        acc_ref[...] = jnp.zeros_like(acc_ref)

    h = jnp.dot(x_ref[...], w1_ref[...], preferred_element_type=jnp.float32)
    h = jnp.maximum(h + b1_ref[...], 0.0)
    acc_ref[...] += jnp.dot(h.astype(w2_ref.dtype), w2_ref[...],
                            preferred_element_type=jnp.float32)

    @pl.when(k == pl.num_programs(1) - 1)
    def _finalize():
        o_ref[...] = (acc_ref[...] + b2_ref[...]).astype(o_ref.dtype)


def _choose_hidden_tile(H: int, tile_h: int):
    """Return (th, H_padded).  th is a lane-dense divisor of H_padded <= tile_h."""
    if H <= tile_h:
        return H, H                              # resident path, no tiling
    cap = max(128, (tile_h // 128) * 128)
    for d in range(cap, 0, -128):                # lane-dense divisors of H
        if H % d == 0:
            return d, H
    return cap, _round_up(H, cap)                # pad d_ff with zero weights


@functools.partial(jax.jit, static_argnames=("tile_rows", "tile_h"))
def feed_forward(x, w1, b1, w2, b2, *, tile_rows=128, tile_h=2048):
    """Fused Linear->ReLU->Linear (+identity Dropout) over the last axis.

    x:  (..., C) token stream (e.g. (num_queries, B, C) for DETR's decoder).
    w1: (C, 4C)   b1: (4C,)   w2: (4C, C)   b2: (C,)
    Weights may be bf16 (recommended); accumulation is always f32.
    """
    orig_shape = x.shape
    C = orig_shape[-1]
    H = w1.shape[1]
    rows = math.prod(orig_shape[:-1])

    compute_dtype = w1.dtype                     # MXU input dtype (bf16)
    out_dtype = x.dtype

    # ---- row tiling: cdiv + zero padding, rounded to 16 (bf16 packing) ------
    tr = min(tile_rows, _round_up(rows, 16))
    tr = _round_up(tr, 16)
    rows_p = _round_up(rows, tr)
    n_r = rows_p // tr

    x2d = x.reshape(rows, C).astype(compute_dtype)
    if rows_p != rows:
        x2d = jnp.pad(x2d, ((0, rows_p - rows), (0, 0)))

    # ---- hidden-axis tiling (only when d_ff does not fit one chunk) ---------
    th, Hp = _choose_hidden_tile(H, tile_h)
    w1c = w1.astype(compute_dtype)
    w2c = w2.astype(compute_dtype)
    b1f = b1.astype(jnp.float32)
    if Hp != H:                                  # zero-padded hidden units are exact
        w1c = jnp.pad(w1c, ((0, 0), (0, Hp - H)))
        w2c = jnp.pad(w2c, ((0, Hp - H), (0, 0)))
        b1f = jnp.pad(b1f, ((0, Hp - H),))
    n_h = Hp // th

    b1_2d = b1f.reshape(1, Hp)
    b2_2d = b2.reshape(1, C).astype(jnp.float32)

    # ---- explicit VMEM budget (pipeline buffers + resident weights) ---------
    cb = jnp.dtype(compute_dtype).itemsize
    ob = jnp.dtype(out_dtype).itemsize
    est = (2 * (tr * C * cb + tr * C * ob)       # double-buffered x / out tiles
           + 2 * ((C * th + th * C) * cb + th * 4 + C * 4)   # weight + bias blocks
           + tr * th * (4 + cb)                  # hidden intermediate (f32 + cast)
           + (tr * C * 4 if n_h > 1 else 0))     # accumulator scratch (kernel B)
    vmem_limit = int(min(64 * 2**20, max(32 * 2**20, 2 * est)))

    if n_h == 1:
        # -------- Kernel A: weights resident, 1-D row grid -------------------
        out2d = pl.pallas_call(
            _ffn_kernel_resident,
            out_shape=jax.ShapeDtypeStruct((rows_p, C), out_dtype),
            grid_spec=pltpu.PrefetchScalarGridSpec(
                num_scalar_prefetch=0,
                grid=(n_r,),
                in_specs=[
                    pl.BlockSpec((tr, C), lambda i: (i, 0)),    # x rows
                    pl.BlockSpec((C, Hp), lambda i: (0, 0)),    # W1 (resident)
                    pl.BlockSpec((1, Hp), lambda i: (0, 0)),    # b1 (resident)
                    pl.BlockSpec((Hp, C), lambda i: (0, 0)),    # W2 (resident)
                    pl.BlockSpec((1, C), lambda i: (0, 0)),     # b2 (resident)
                ],
                out_specs=pl.BlockSpec((tr, C), lambda i: (i, 0)),
            ),
            compiler_params=pltpu.CompilerParams(
                dimension_semantics=("parallel",),
                vmem_limit_bytes=vmem_limit,
            ),
        )(x2d, w1c, b1_2d, w2c, b2_2d)
    else:
        # -------- Kernel B: hidden reduction axis + f32 accumulator ----------
        out2d = pl.pallas_call(
            _ffn_kernel_accum,
            out_shape=jax.ShapeDtypeStruct((rows_p, C), out_dtype),
            grid_spec=pltpu.PrefetchScalarGridSpec(
                num_scalar_prefetch=0,
                grid=(n_r, n_h),                 # reduction (hidden) axis last
                in_specs=[
                    pl.BlockSpec((tr, C), lambda i, k: (i, 0)),   # x (resident over k)
                    pl.BlockSpec((C, th), lambda i, k: (0, k)),   # W1 chunk
                    pl.BlockSpec((1, th), lambda i, k: (0, k)),   # b1 chunk
                    pl.BlockSpec((th, C), lambda i, k: (k, 0)),   # W2 chunk
                    pl.BlockSpec((1, C), lambda i, k: (0, 0)),    # b2
                ],
                out_specs=pl.BlockSpec((tr, C), lambda i, k: (i, 0)),
                scratch_shapes=[pltpu.VMEM((tr, C), jnp.float32)],
            ),
            compiler_params=pltpu.CompilerParams(
                dimension_semantics=("parallel", "arbitrary"),
                vmem_limit_bytes=vmem_limit,
            ),
        )(x2d, w1c, b1_2d, w2c, b2_2d)

    if rows_p != rows:
        out2d = out2d[:rows]
    return out2d.reshape(orig_shape)


def init_params(key, n_embd, weight_dtype=jnp.bfloat16, bias_dtype=jnp.float32):
    """PyTorch-style Linear init U(-1/sqrt(fan_in), 1/sqrt(fan_in)).

    Weights returned as (in_features, out_features), bf16 by default
    (f32 accumulation happens inside the kernel)."""
    hidden = 4 * n_embd
    k1, k2, k3, k4 = jax.random.split(key, 4)
    bound1 = 1.0 / math.sqrt(n_embd)
    bound2 = 1.0 / math.sqrt(hidden)
    w1 = jax.random.uniform(k1, (n_embd, hidden), jnp.float32, -bound1, bound1)
    b1 = jax.random.uniform(k2, (hidden,), jnp.float32, -bound1, bound1)
    w2 = jax.random.uniform(k3, (hidden, n_embd), jnp.float32, -bound2, bound2)
    b2 = jax.random.uniform(k4, (n_embd,), jnp.float32, -bound2, bound2)
    return (w1.astype(weight_dtype), b1.astype(bias_dtype),
            w2.astype(weight_dtype), b2.astype(bias_dtype))


if __name__ == "__main__":
    # DETR-consistent small shapes: the FFNs run on the decoder output of shape
    # (num_queries, batch, d_model) with d_model = 256 (lane-dense).
    # rows = 100*2 = 200 is not a multiple of the 128-row tile -> exercises
    # cdiv + zero padding; d_ff = 1024 <= tile_h -> resident kernel path.
    num_queries, B, n_embd = 100, 2, 256

    key = jax.random.PRNGKey(0)
    k_x, k_p = jax.random.split(key)
    x = jax.random.normal(k_x, (num_queries, B, n_embd), dtype=jnp.float32)
    w1, b1, w2, b2 = init_params(k_p, n_embd)      # bf16 weights, f32 biases

    out = feed_forward(x, w1, b1, w2, b2)
    out = jax.block_until_ready(out)
    assert out.shape == x.shape

    # Reference with the same mixed precision (bf16 MXU inputs, f32 accum).
    x2 = x.reshape(-1, n_embd).astype(w1.dtype)
    h_ref = jnp.dot(x2, w1, preferred_element_type=jnp.float32) + b1
    h_ref = jnp.maximum(h_ref, 0.0)
    ref = jnp.dot(h_ref.astype(w2.dtype), w2,
                  preferred_element_type=jnp.float32) + b2
    ref = ref.reshape(x.shape).astype(x.dtype)
    assert jnp.allclose(out, ref, atol=2e-3, rtol=2e-3), \
        "mismatch vs mixed-precision reference"

    # Looser sanity check against a pure-f32 reference of the PyTorch math.
    ref32 = (jnp.maximum(x @ w1.astype(jnp.float32) + b1, 0.0)
             @ w2.astype(jnp.float32) + b2)
    assert jnp.allclose(out, ref32, atol=0.1, rtol=0.1), \
        "mismatch vs f32 reference"

    print("KERNEL_OK")
</pallas_src>

<mosaic_0001>
module attributes {stable_mosaic.version = 11 : i64} {
  func.func @_ffn_kernel_resident(%arg0: i32, %arg1: memref<128x256xbf16, #tpu.memory_space<vmem>>, %arg2: memref<256x1024xbf16, #tpu.memory_space<vmem>>, %arg3: memref<1x1024xf32, #tpu.memory_space<vmem>>, %arg4: memref<1024x256xbf16, #tpu.memory_space<vmem>>, %arg5: memref<1x256xf32, #tpu.memory_space<vmem>>, %arg6: memref<128x256xf32, #tpu.memory_space<vmem>>) attributes {dimension_semantics = [#tpu.dimension_semantics<parallel>], iteration_bounds = array<i64: 2>, scalar_prefetch = 0 : i64, scratch_operands = 0 : i64, tpu.core_type = #tpu.core_type<tc>, window_params = [{transform_indices = @transform_0, window_bounds = array<i64: 128, 256>}, {pipeline_mode = #tpu.pipeline_mode<synchronous>, transform_indices = @transform_1, window_bounds = array<i64: 256, 1024>}, {pipeline_mode = #tpu.pipeline_mode<synchronous>, transform_indices = @transform_2, window_bounds = array<i64: 1, 1024>}, {pipeline_mode = #tpu.pipeline_mode<synchronous>, transform_indices = @transform_3, window_bounds = array<i64: 1024, 256>}, {pipeline_mode = #tpu.pipeline_mode<synchronous>, transform_indices = @transform_4, window_bounds = array<i64: 1, 256>}, {transform_indices = @transform_5, window_bounds = array<i64: 128, 256>}]} {
    %c0 = arith.constant 0 : index
    %c0_0 = arith.constant 0 : index
    %0 = vector.load %arg1[%c0, %c0_0] : memref<128x256xbf16, #tpu.memory_space<vmem>>, vector<128x256xbf16>
    %c0_1 = arith.constant 0 : index
    %c0_2 = arith.constant 0 : index
    %1 = vector.load %arg2[%c0_1, %c0_2] : memref<256x1024xbf16, #tpu.memory_space<vmem>>, vector<256x1024xbf16>
    %cst = arith.constant dense<0.000000e+00> : vector<128x1024xf32>
    %2 = tpu.matmul %0, %1, %cst {dimension_numbers = #tpu.dot_dimension_numbers<[1], [0], [0], [1], [0, 0, 1, 1], [], []>} : vector<128x256xbf16>, vector<256x1024xbf16>, vector<128x1024xf32> -> vector<128x1024xf32>
    %c0_3 = arith.constant 0 : index
    %c0_4 = arith.constant 0 : index
    %3 = vector.load %arg3[%c0_3, %c0_4] : memref<1x1024xf32, #tpu.memory_space<vmem>>, vector<1x1024xf32>
    %4 = vector.broadcast %3 : vector<1x1024xf32> to vector<128x1024xf32>
    %5 = arith.addf %2, %4 : vector<128x1024xf32>
    %cst_5 = arith.constant 0.000000e+00 : f32
    %6 = vector.broadcast %cst_5 : f32 to vector<128x1024xf32>
    %7 = arith.maximumf %5, %6 : vector<128x1024xf32>
    %8 = arith.truncf %7 : vector<128x1024xf32> to vector<128x1024xbf16>
    %c0_6 = arith.constant 0 : index
    %c0_7 = arith.constant 0 : index
    %9 = vector.load %arg4[%c0_6, %c0_7] : memref<1024x256xbf16, #tpu.memory_space<vmem>>, vector<1024x256xbf16>
    %cst_8 = arith.constant dense<0.000000e+00> : vector<128x256xf32>
    %10 = tpu.matmul %8, %9, %cst_8 {dimension_numbers = #tpu.dot_dimension_numbers<[1], [0], [0], [1], [0, 0, 1, 1], [], []>} : vector<128x1024xbf16>, vector<1024x256xbf16>, vector<128x256xf32> -> vector<128x256xf32>
    %c0_9 = arith.constant 0 : index
    %c0_10 = arith.constant 0 : index
    %11 = vector.load %arg5[%c0_9, %c0_10] : memref<1x256xf32, #tpu.memory_space<vmem>>, vector<1x256xf32>
    %12 = vector.broadcast %11 : vector<1x256xf32> to vector<128x256xf32>
    %13 = arith.addf %10, %12 : vector<128x256xf32>
    %c0_11 = arith.constant 0 : index
    %c0_12 = arith.constant 0 : index
    %14 = vector.load %arg6[%c0_11, %c0_12] : memref<128x256xf32, #tpu.memory_space<vmem>>, vector<128x256xf32>
    tpu.vector_store %arg6[%c0_11, %c0_12], %13 {strides = array<i32>} : memref<128x256xf32, #tpu.memory_space<vmem>>, vector<128x256xf32>,
    return
  }
  func.func @transform_0(%arg0: i32) -> (i32, i32) {
    %c0_i32 = arith.constant 0 : i32
    %c0_i32_0 = arith.constant 0 : i32
    return %arg0, %c0_i32 : i32, i32
  }
  func.func @transform_1(%arg0: i32) -> (i32, i32) {
    %c0_i32 = arith.constant 0 : i32
    %c0_i32_0 = arith.constant 0 : i32
    %c0_i32_1 = arith.constant 0 : i32
    return %c0_i32, %c0_i32_0 : i32, i32
  }
  func.func @transform_2(%arg0: i32) -> (i32, i32) {
    %c0_i32 = arith.constant 0 : i32
    %c0_i32_0 = arith.constant 0 : i32
    %c0_i32_1 = arith.constant 0 : i32
    return %c0_i32, %c0_i32_0 : i32, i32
  }
  func.func @transform_3(%arg0: i32) -> (i32, i32) {
    %c0_i32 = arith.constant 0 : i32
    %c0_i32_0 = arith.constant 0 : i32
    %c0_i32_1 = arith.constant 0 : i32
    return %c0_i32, %c0_i32_0 : i32, i32
  }
  func.func @transform_4(%arg0: i32) -> (i32, i32) {
    %c0_i32 = arith.constant 0 : i32
    %c0_i32_0 = arith.constant 0 : i32
    %c0_i32_1 = arith.constant 0 : i32
    return %c0_i32, %c0_i32_0 : i32, i32
  }
  func.func @transform_5(%arg0: i32) -> (i32, i32) {
    %c0_i32 = arith.constant 0 : i32
    %c0_i32_0 = arith.constant 0 : i32
    return %arg0, %c0_i32 : i32, i32
  }
}

</mosaic_0001>

<llo_original>
// kernel: feed_forward.1
$region0: #{feed_forward.1}
  #allocation0 [shape = 'u32[]', space=smem, size = 0x4, offset = 0x4, fixed_abs, tag = 'smem constant byte address 0x4 - core index']
  #allocation1 [shape = 'u32[144,128]{1,0:T(1,128)}', space=vmem, size = 0x12000, scoped, tag = 'internal scratch']
  %s0 = inlined_call_operand.vmem [shape: bf16[256,256], index: 0, kind: input, shape index: {}]
  %s1 = inlined_call_operand.vmem [shape: bf16[256,1024], index: 1, kind: input, shape index: {}]
  %s2 = inlined_call_operand.vmem [shape: f32[1,1024], index: 2, kind: input, shape index: {}]
  %s3 = inlined_call_operand.hbm [shape: bf16[1024,256], index: 3, kind: input, shape index: {}]
  %s4 = inlined_call_operand.vmem [shape: f32[1,256], index: 4, kind: input, shape index: {}]
  %s5 = inlined_call_operand.vmem [shape: f32[256,256], index: 5, kind: output, shape index: {}]
  %s6 = sld [smem:[#allocation0]]
  $region57: #{feed_forward.1} parent=0
    _
  %s8 = ssub.s32 1, %s6
  %s9 = scalar_select 0, %s8, %s6
  $region1: #{feed_forward.1} parent=0
    #allocation2 [shape = 'u8[524288]{0}', space=vmem, size = 0x80000, scoped, tag = 'input window, operand 3, single buffered']
    #allocation3 [shape = 's32[2]{0}', space=sflag, size = 0x8, scoped, tag = 'scoped memory for feed_forward.1']
    %10 = vsyncpa [#allocation3], 0
    loop: start=0, step=1, limit=4
    $region2: #{feed_forward.1} parent=1 // loop_pre_header
      _
    $region3: #{feed_forward.1} parent=1 // loop_header
      %s12 = sphi 0, %s16
      %p13 = scmp.ge.s32.totalorder %s12, 4
      %s22 = sphi 0, %s24
      %s25 = sphi 0, %s22
      %s26 = sphi 0, %s25
      %s42 = sphi 0, %s26
      %s46 = sphi 0, %s46
      %s48 = sphi 0, %s46
      %s49 = sphi 0, %s48
      %s63 = sphi 0, %s49
      %s67 = sphi 0, %s67
      %s69 = sphi 0, %s67
      %s70 = sphi 0, %s69
      %s84 = sphi 0, %s70
      %s88 = sphi 0, %s88
      %s90 = sphi 0, %s88
      %s91 = sphi 0, %s90
      %s105 = sphi 0, %s91
      %s109 = sphi 0, %s109
      %s111 = sphi 0, %s109
      %s112 = sphi 0, %s111
      %s126 = sphi 0, %s112
      %s132 = sphi 0, %s134
      %s135 = sphi 0, %s132
      %s136 = sphi 0, %s135
      %s152 = sphi 0, %s136
    $region4: #{feed_forward.1} parent=1 // loop_header_branch
      %15 = sbr.rel (%p13) target = $region8
    $region5: #{feed_forward.1} parent=1 // loop_body
      %s17 = ssub.s32 %s12, 1
      %s18 = ssub.s32 %s12, 2
      %s19 = sadd.s32 %s12, 1
      %s20 = ssub.s32 %s12, %s19
      %p21 = scmp.eq.s32.totalorder %s20, 0
      %s23 = sadd.s32 %s22, 1
      %s24 = scalar_select %p21, %s22, %s23
      %p27 = pneg %p21
      %p28 = scmp.eq.s32.totalorder %s12, 1
      %p29 = por %p27, %p28
      %p30 = scmp.ne.s32.totalorder %s22, %s25
      %p31 = scmp.eq.s32.totalorder %s12, 0
      %p32 = por %p30, %p31
      %p33 = scmp.ne.s32.totalorder %s22, %s25
      %p34 = scmp.eq.s32.totalorder %s17, 1
      %p35 = por %p33, %p34
      %p36 = scmp.ne.s32.totalorder %s25, %s26
      %p37 = scmp.eq.s32.totalorder %s17, 0
      %p38 = por %p36, %p37
      %p39 = scmp.ne.s32.totalorder %s25, %s26
      %p40 = scmp.eq.s32.totalorder %s18, 1
      %p41 = por %p39, %p40
      %p43 = scmp.ne.s32.totalorder %s26, %s42
      %p44 = scmp.eq.s32.totalorder %s18, 0
      %p45 = por %p43, %p44
      %s47 = sadd.s32 %s46, 1
      %p50 = scmp.eq.s32.totalorder %s12, 1
      %p51 = scmp.ne.s32.totalorder %s46, %s48
      %p52 = scmp.eq.s32.totalorder %s12, 0
      %p53 = por %p51, %p52
      %p54 = scmp.ne.s32.totalorder %s46, %s48
      %p55 = scmp.eq.s32.totalorder %s17, 1
      %p56 = por %p54, %p55
      %p57 = scmp.ne.s32.totalorder %s48, %s49
      %p58 = scmp.eq.s32.totalorder %s17, 0
      %p59 = por %p57, %p58
      %p60 = scmp.ne.s32.totalorder %s48, %s49
      %p61 = scmp.eq.s32.totalorder %s18, 1
      %p62 = por %p60, %p61
      %p64 = scmp.ne.s32.totalorder %s49, %s63
      %p65 = scmp.eq.s32.totalorder %s18, 0
      %p66 = por %p64, %p65
      %s68 = sadd.s32 %s67, 1
      %p71 = scmp.eq.s32.totalorder %s12, 1
      %p72 = scmp.ne.s32.totalorder %s67, %s69
      %p73 = scmp.eq.s32.totalorder %s12, 0
      %p74 = por %p72, %p73
      %p75 = scmp.ne.s32.totalorder %s67, %s69
      %p76 = scmp.eq.s32.totalorder %s17, 1
      %p77 = por %p75, %p76
      %p78 = scmp.ne.s32.totalorder %s69, %s70
      %p79 = scmp.eq.s32.totalorder %s17, 0
      %p80 = por %p78, %p79
      %p81 = scmp.ne.s32.totalorder %s69, %s70
      %p82 = scmp.eq.s32.totalorder %s18, 1
      %p83 = por %p81, %p82
      %p85 = scmp.ne.s32.totalorder %s70, %s84
      %p86 = scmp.eq.s32.totalorder %s18, 0
      %p87 = por %p85, %p86
      %s89 = sadd.s32 %s88, 1
      %p92 = scmp.eq.s32.totalorder %s12, 1
      %p93 = scmp.ne.s32.totalorder %s88, %s90
      %p94 = scmp.eq.s32.totalorder %s12, 0
      %p95 = por %p93, %p94
      %p96 = scmp.ne.s32.totalorder %s88, %s90
      %p97 = scmp.eq.s32.totalorder %s17, 1
      %p98 = por %p96, %p97
      %p99 = scmp.ne.s32.totalorder %s90, %s91
      %p100 = scmp.eq.s32.totalorder %s17, 0
      %p101 = por %p99, %p100
      %p102 = scmp.ne.s32.totalorder %s90, %s91
      %p103 = scmp.eq.s32.totalorder %s18, 1
      %p104 = por %p102, %p103
      %p106 = scmp.ne.s32.totalorder %s91, %s105
      %p107 = scmp.eq.s32.totalorder %s18, 0
      %p108 = por %p106, %p107
      %s110 = sadd.s32 %s109, 1
      %p113 = scmp.eq.s32.totalorder %s12, 1
      %p114 = scmp.ne.s32.totalorder %s109, %s111
      %p115 = scmp.eq.s32.totalorder %s12, 0
      %p116 = por %p114, %p115
      %p117 = scmp.ne.s32.totalorder %s109, %s111
      %p118 = scmp.eq.s32.totalorder %s17, 1
      %p119 = por %p117, %p118
      %p120 = scmp.ne.s32.totalorder %s111, %s112
      %p121 = scmp.eq.s32.totalorder %s17, 0
      %p122 = por %p120, %p121
      %p123 = scmp.ne.s32.totalorder %s111, %s112
      %p124 = scmp.eq.s32.totalorder %s18, 1
      %p125 = por %p123, %p124
      %p127 = scmp.ne.s32.totalorder %s112, %s126
      %p128 = scmp.eq.s32.totalorder %s18, 0
      %p129 = por %p127, %p128
      %s130 = ssub.s32 %s12, %s19
      %p131 = scmp.eq.s32.totalorder %s130, 0
      %s133 = sadd.s32 %s132, 1
      %s134 = scalar_select %p131, %s132, %s133
      %p137 = pneg %p131
      %p138 = scmp.eq.s32.totalorder %s12, 1
      %p139 = por %p137, %p138
      %p140 = scmp.ne.s32.totalorder %s132, %s135
      %p141 = scmp.eq.s32.totalorder %s12, 0
      %p142 = por %p140, %p141
      %p143 = scmp.ne.s32.totalorder %s132, %s135
      %p144 = scmp.eq.s32.totalorder %s17, 1
      %p145 = por %p143, %p144
      %p146 = scmp.ne.s32.totalorder %s135, %s136
      %p147 = scmp.eq.s32.totalorder %s17, 0
      %p148 = por %p146, %p147
      %p149 = scmp.ne.s32.totalorder %s135, %s136
      %p150 = scmp.eq.s32.totalorder %s18, 1
      %p151 = por %p149, %p150
      %p153 = scmp.ne.s32.totalorder %s136, %s152
      %p154 = scmp.eq.s32.totalorder %s18, 0
      %p155 = por %p153, %p154
      %p156 = scmp.le.s32.totalorder 1, %s12
      %p157 = scmp.lt.s32.totalorder %s12, 3
      %p158 = pnand %p156, %p157
      %p159 = pneg %p158
      // Predicated region
      $region9: #{feed_forward.1} parent=5 // pred_check
        _
      $region10: #{feed_forward.1} parent=5 // pred_check_branch
        %161 = sbr.rel (%p158) target = $region12
      $region11: #{feed_forward.1} parent=5 // pred_region
        %s162 = ssub.s32 %s12, 1
        // Predicated region
        $region13: #{feed_forward.1} parent=11 // pred_check
          %p163 = pneg %p59
        $region14: #{feed_forward.1} parent=11 // pred_check_branch
          %165 = sbr.rel (%p163) target = $region16
        $region15: #{feed_forward.1} parent=11 // pred_region
          _
        $region16: #{feed_forward.1} parent=11 // pred_fallthru
          _
        // Predicated region
        $region17: #{feed_forward.1} parent=11 // pred_check
          %p166 = pneg %p80
        $region18: #{feed_forward.1} parent=11 // pred_check_branch
          %168 = sbr.rel (%p166) target = $region20
        $region19: #{feed_forward.1} parent=11 // pred_region
          _
        $region20: #{feed_forward.1} parent=11 // pred_fallthru
          _
        // Predicated region
        $region21: #{feed_forward.1} parent=11 // pred_check
          %p169 = pneg %p101
        $region22: #{feed_forward.1} parent=11 // pred_check_branch
          %171 = sbr.rel (%p169) target = $region24
        $region23: #{feed_forward.1} parent=11 // pred_region
          %s173 = ssub.s32 16384, 16384
          %174 = vsyncadd [#allocation3], %s173
          %s175 = sshll.u32 [#allocation2], 4
          %s176 = int_to_ptr.vmem [resolvable:$true] %s175
          %181 = dma.hbm_to_vmem [thread:$0]  %s3, 16384, %s176, [#allocation3], 128, 128, 8
        $region24: #{feed_forward.1} parent=11 // pred_fallthru
          _
        // Predicated region
        $region25: #{feed_forward.1} parent=11 // pred_check
          %p182 = pneg %p122
        $region26: #{feed_forward.1} parent=11 // pred_check_branch
          %184 = sbr.rel (%p182) target = $region28
        $region27: #{feed_forward.1} parent=11 // pred_region
          _
        $region28: #{feed_forward.1} parent=11 // pred_fallthru
          _
      $region12: #{feed_forward.1} parent=5 // pred_fallthru
        _
      %p185 = scmp.lt.s32.totalorder %s12, 2
      // Predicated region
      $region29: #{feed_forward.1} parent=5 // pred_check
        %p186 = pneg %p185
      $region30: #{feed_forward.1} parent=5 // pred_check_branch
        %188 = sbr.rel (%p186) target = $region32
      $region31: #{feed_forward.1} parent=5 // pred_region
        // Predicated region
        $region33: #{feed_forward.1} parent=31 // pred_check
          %p189 = pneg %p32
        $region34: #{feed_forward.1} parent=31 // pred_check_branch
          %191 = sbr.rel (%p189) target = $region36
        $region35: #{feed_forward.1} parent=31 // pred_region
          %s192 = smul.u32 16, %s12
          %p193 = scmp.lt.s32.totalorder %s192, 31
          %s194 = scalar_select %p193, %s192, 31
          %s195 = smul.addr %s194, 2
          %s196 = smul.addr %s195, 4
          %s197 = scalar_lea.vmem %s0, %s196
          %s198 = smul.u32 16, %s12
        $region36: #{feed_forward.1} parent=31 // pred_fallthru
          _
      $region32: #{feed_forward.1} parent=5 // pred_fallthru
        _
      %p199 = scmp.le.s32.totalorder 1, %s12
      %p200 = scmp.lt.s32.totalorder %s12, 3
      %p201 = pnand %p199, %p200
      %p202 = pneg %p201
      // Predicated region
      $region37: #{feed_forward.1} parent=5 // pred_check
        _
      $region38: #{feed_forward.1} parent=5 // pred_check_branch
        %204 = sbr.rel (%p201) target = $region40
      $region39: #{feed_forward.1} parent=5 // pred_region
        %s205 = ssub.s32 %s12, 1
        // Predicated region
        $region41: #{feed_forward.1} parent=39 // pred_check
          %p206 = pneg %p101
        $region42: #{feed_forward.1} parent=39 // pred_check_branch
          %208 = sbr.rel (%p206) target = $region44
        $region43: #{feed_forward.1} parent=39 // pred_region
          %209 = dma.done [#allocation3], 16384
        $region44: #{feed_forward.1} parent=39 // pred_fallthru
          _
        %s210 = smul.u32 16, %s17
        %p211 = scmp.lt.s32.totalorder %s210, 31
        %s212 = scalar_select %p211, %s210, 31
        %s213 = smul.addr %s212, 2
        %s214 = smul.addr %s213, 4
        %s215 = scalar_lea.vmem %s0, %s214
        %p216 = pneg %p38
        %p217 = pneg %p35
        %p218 = pneg %p59
        %p219 = pneg %p56
        %p220 = pneg %p80
        %p221 = pneg %p77
        %p222 = pneg %p101
        %p223 = pneg %p98
        %p224 = pneg %p122
        %p225 = pneg %p119
        %p226 = pneg %p148
        %p227 = pneg %p145
        %s228 = smul.u32 16, %s17
        %p229 = scmp.lt.s32.totalorder %s228, 31
        %s230 = scalar_select %p229, %s228, 31
        %s231 = smul.addr %s230, 2
        %s232 = smul.addr %s231, 8
        %s233 = scalar_lea.vmem %s5, %s232
        %s234 = smul.u32 16, %s17
        %p235 = scmp.lt.s32.totalorder %s234, 31
        %s236 = scalar_select %p235, %s234, 31
        %s237 = smul.addr %s236, 2
        %s238 = smul.addr %s237, 4
        %s239 = scalar_lea.vmem %s0, %s238
        %s240 = smul.u32 16, %s17
        %s241 = smul.u32 16, %s17
        %p242 = scmp.lt.s32.totalorder %s241, 31
        %s243 = scalar_select %p242, %s241, 31
        %s244 = smul.addr %s243, 2
        %s245 = smul.addr %s244, 8
        %s246 = scalar_lea.vmem %s5, %s245
        %s247 = smul.u32 16, %s17
        %v248 = vld [vmem:[%s239] sm:$0xff]
        %v249 = vld [vmem:[%s239 + $0x8] sm:$0xff]
        %v250 = vld [vmem:[%s239 + $0x10] sm:$0xff]
        %v251 = vld [vmem:[%s239 + $0x18] sm:$0xff]
        %v252 = vld [vmem:[%s239 + $0x20] sm:$0xff]
        %v253 = vld [vmem:[%s239 + $0x28] sm:$0xff]
        %v254 = vld [vmem:[%s239 + $0x30] sm:$0xff]
        %v255 = vld [vmem:[%s239 + $0x38] sm:$0xff]
        %v256 = vld [vmem:[%s239 + $0x40] sm:$0xff]
        %v257 = vld [vmem:[%s239 + $0x48] sm:$0xff]
        %v258 = vld [vmem:[%s239 + $0x50] sm:$0xff]
        %v259 = vld [vmem:[%s239 + $0x58] sm:$0xff]
        %v260 = vld [vmem:[%s239 + $0x60] sm:$0xff]
        %v261 = vld [vmem:[%s239 + $0x68] sm:$0xff]
        %v262 = vld [vmem:[%s239 + $0x70] sm:$0xff]
        %v263 = vld [vmem:[%s239 + $0x78] sm:$0xff]
        %v264 = vld [vmem:[%s1] sm:$0xff]
        %v265 = vld [vmem:[%s1 + $0x8] sm:$0xff]
        %v266 = vld [vmem:[%s1 + $0x10] sm:$0xff]
        %v267 = vld [vmem:[%s1 + $0x18] sm:$0xff]
        %v268 = vld [vmem:[%s1 + $0x20] sm:$0xff]
        %v269 = vld [vmem:[%s1 + $0x28] sm:$0xff]
        %v270 = vld [vmem:[%s1 + $0x30] sm:$0xff]
        %v271 = vld [vmem:[%s1 + $0x38] sm:$0xff]
        %v272 = vld [vmem:[%s1 + $0x40] sm:$0xff]
        %v273 = vld [vmem:[%s1 + $0x48] sm:$0xff]
        %v274 = vld [vmem:[%s1 + $0x50] sm:$0xff]
        %v275 = vld [vmem:[%s1 + $0x58] sm:$0xff]
        %v276 = vld [vmem:[%s1 + $0x60] sm:$0xff]
        %v277 = vld [vmem:[%s1 + $0x68] sm:$0xff]
        %v278 = vld [vmem:[%s1 + $0x70] sm:$0xff]
        %v279 = vld [vmem:[%s1 + $0x78] sm:$0xff]
        %v280 = vld [vmem:[%s1 + $0x80] sm:$0xff]
        %v281 = vld [vmem:[%s1 + $0x88] sm:$0xff]
        %v282 = vld [vmem:[%s1 + $0x90] sm:$0xff]
        %v283 = vld [vmem:[%s1 + $0x98] sm:$0xff]
        %v284 = vld [vmem:[%s1 + $0xa0] sm:$0xff]
        %v285 = vld [vmem:[%s1 + $0xa8] sm:$0xff]
        %v286 = vld [vmem:[%s1 + $0xb0] sm:$0xff]
        %v287 = vld [vmem:[%s1 + $0xb8] sm:$0xff]
        %v288 = vld [vmem:[%s1 + $0xc0] sm:$0xff]
        %v289 = vld [vmem:[%s1 + $0xc8] sm:$0xff]
        %v290 = vld [vmem:[%s1 + $0xd0] sm:$0xff]
        %v291 = vld [vmem:[%s1 + $0xd8] sm:$0xff]
        %v292 = vld [vmem:[%s1 + $0xe0] sm:$0xff]
        %v293 = vld [vmem:[%s1 + $0xe8] sm:$0xff]
        %v294 = vld [vmem:[%s1 + $0xf0] sm:$0xff]
        %v295 = vld [vmem:[%s1 + $0xf8] sm:$0xff]
        %v296 = vld [vmem:[%s1 + $0x100] sm:$0xff]
        %v297 = vld [vmem:[%s1 + $0x108] sm:$0xff]
        %v298 = vld [vmem:[%s1 + $0x110] sm:$0xff]
        %v299 = vld [vmem:[%s1 + $0x118] sm:$0xff]
        %v300 = vld [vmem:[%s1 + $0x120] sm:$0xff]
        %v301 = vld [vmem:[%s1 + $0x128] sm:$0xff]
        %v302 = vld [vmem:[%s1 + $0x130] sm:$0xff]
        %v303 = vld [vmem:[%s1 + $0x138] sm:$0xff]
        %v304 = vld [vmem:[%s1 + $0x140] sm:$0xff]
        %v305 = vld [vmem:[%s1 + $0x148] sm:$0xff]
        %v306 = vld [vmem:[%s1 + $0x150] sm:$0xff]
        %v307 = vld [vmem:[%s1 + $0x158] sm:$0xff]
        %v308 = vld [vmem:[%s1 + $0x160] sm:$0xff]
        %v309 = vld [vmem:[%s1 + $0x168] sm:$0xff]
        %v310 = vld [vmem:[%s1 + $0x170] sm:$0xff]
        %v311 = vld [vmem:[%s1 + $0x178] sm:$0xff]
        %v312 = vld [vmem:[%s1 + $0x180] sm:$0xff]
        %v313 = vld [vmem:[%s1 + $0x188] sm:$0xff]
        %v314 = vld [vmem:[%s1 + $0x190] sm:$0xff]
        %v315 = vld [vmem:[%s1 + $0x198] sm:$0xff]
        %v316 = vld [vmem:[%s1 + $0x1a0] sm:$0xff]
        %v317 = vld [vmem:[%s1 + $0x1a8] sm:$0xff]
        %v318 = vld [vmem:[%s1 + $0x1b0] sm:$0xff]
        %v319 = vld [vmem:[%s1 + $0x1b8] sm:$0xff]
        %v320 = vld [vmem:[%s1 + $0x1c0] sm:$0xff]
        %v321 = vld [vmem:[%s1 + $0x1c8] sm:$0xff]
        %v322 = vld [vmem:[%s1 + $0x1d0] sm:$0xff]
        %v323 = vld [vmem:[%s1 + $0x1d8] sm:$0xff]
        %v324 = vld [vmem:[%s1 + $0x1e0] sm:$0xff]
        %v325 = vld [vmem:[%s1 + $0x1e8] sm:$0xff]
        %v326 = vld [vmem:[%s1 + $0x1f0] sm:$0xff]
        %v327 = vld [vmem:[%s1 + $0x1f8] sm:$0xff]
        %v328 = vld [vmem:[%s1 + $0x200] sm:$0xff]
        %v329 = vld [vmem:[%s1 + $0x208] sm:$0xff]
        %v330 = vld [vmem:[%s1 + $0x210] sm:$0xff]
        %v331 = vld [vmem:[%s1 + $0x218] sm:$0xff]
        %v332 = vld [vmem:[%s1 + $0x220] sm:$0xff]
        %v333 = vld [vmem:[%s1 + $0x228] sm:$0xff]
        %v334 = vld [vmem:[%s1 + $0x230] sm:$0xff]
        %v335 = vld [vmem:[%s1 + $0x238] sm:$0xff]
        %v336 = vld [vmem:[%s1 + $0x240] sm:$0xff]
        %v337 = vld [vmem:[%s1 + $0x248] sm:$0xff]
        %v338 = vld [vmem:[%s1 + $0x250] sm:$0xff]
        %v339 = vld [vmem:[%s1 + $0x258] sm:$0xff]
        %v340 = vld [vmem:[%s1 + $0x260] sm:$0xff]
        %v341 = vld [vmem:[%s1 + $0x268] sm:$0xff]
        %v342 = vld [vmem:[%s1 + $0x270] sm:$0xff]
        %v343 = vld [vmem:[%s1 + $0x278] sm:$0xff]
        %v344 = vld [vmem:[%s1 + $0x280] sm:$0xff]
        %v345 = vld [vmem:[%s1 + $0x288] sm:$0xff]
        %v346 = vld [vmem:[%s1 + $0x290] sm:$0xff]
        %v347 = vld [vmem:[%s1 + $0x298] sm:$0xff]
        %v348 = vld [vmem:[%s1 + $0x2a0] sm:$0xff]
        %v349 = vld [vmem:[%s1 + $0x2a8] sm:$0xff]
        %v350 = vld [vmem:[%s1 + $0x2b0] sm:$0xff]
        %v351 = vld [vmem:[%s1 + $0x2b8] sm:$0xff]
        %v352 = vld [vmem:[%s1 + $0x2c0] sm:$0xff]
        %v353 = vld [vmem:[%s1 + $0x2c8] sm:$0xff]
        %v354 = vld [vmem:[%s1 + $0x2d0] sm:$0xff]
        %v355 = vld [vmem:[%s1 + $0x2d8] sm:$0xff]
        %v356 = vld [vmem:[%s1 + $0x2e0] sm:$0xff]
        %v357 = vld [vmem:[%s1 + $0x2e8] sm:$0xff]
        %v358 = vld [vmem:[%s1 + $0x2f0] sm:$0xff]
        %v359 = vld [vmem:[%s1 + $0x2f8] sm:$0xff]
        %v360 = vld [vmem:[%s1 + $0x300] sm:$0xff]
        %v361 = vld [vmem:[%s1 + $0x308] sm:$0xff]
        %v362 = vld [vmem:[%s1 + $0x310] sm:$0xff]
        %v363 = vld [vmem:[%s1 + $0x318] sm:$0xff]
        %v364 = vld [vmem:[%s1 + $0x320] sm:$0xff]
        %v365 = vld [vmem:[%s1 + $0x328] sm:$0xff]
        %v366 = vld [vmem:[%s1 + $0x330] sm:$0xff]
        %v367 = vld [vmem:[%s1 + $0x338] sm:$0xff]
        %v368 = vld [vmem:[%s1 + $0x340] sm:$0xff]
        %v369 = vld [vmem:[%s1 + $0x348] sm:$0xff]
        %v370 = vld [vmem:[%s1 + $0x350] sm:$0xff]
        %v371 = vld [vmem:[%s1 + $0x358] sm:$0xff]
        %v372 = vld [vmem:[%s1 + $0x360] sm:$0xff]
        %v373 = vld [vmem:[%s1 + $0x368] sm:$0xff]
        %v374 = vld [vmem:[%s1 + $0x370] sm:$0xff]
        %v375 = vld [vmem:[%s1 + $0x378] sm:$0xff]
        %v376 = vld [vmem:[%s1 + $0x380] sm:$0xff]
        %v377 = vld [vmem:[%s1 + $0x388] sm:$0xff]
        %v378 = vld [vmem:[%s1 + $0x390] sm:$0xff]
        %v379 = vld [vmem:[%s1 + $0x398] sm:$0xff]
        %v380 = vld [vmem:[%s1 + $0x3a0] sm:$0xff]
        %v381 = vld [vmem:[%s1 + $0x3a8] sm:$0xff]
        %v382 = vld [vmem:[%s1 + $0x3b0] sm:$0xff]
        %v383 = vld [vmem:[%s1 + $0x3b8] sm:$0xff]
        %v384 = vld [vmem:[%s1 + $0x3c0] sm:$0xff]
        %v385 = vld [vmem:[%s1 + $0x3c8] sm:$0xff]
        %v386 = vld [vmem:[%s1 + $0x3d0] sm:$0xff]
        %v387 = vld [vmem:[%s1 + $0x3d8] sm:$0xff]
        %v388 = vld [vmem:[%s1 + $0x3e0] sm:$0xff]
        %v389 = vld [vmem:[%s1 + $0x3e8] sm:$0xff]
        %v390 = vld [vmem:[%s1 + $0x3f0] sm:$0xff]
        %v391 = vld [vmem:[%s1 + $0x3f8] sm:$0xff]
        %v392 = vld [vmem:[%s2] sm:$0xff]
        %v394 = vlaneseq
        %v395 = vshrl.u32 %v394, 7
        %v396 = vsub.s32 0, %v395
        %v397 = vrot.slane %v392, %v396
        %v398 = vlaneseq
        %v399 = vshrl.u32 %v398, 7
        %v400 = vsub.s32 1, %v399
        %v401 = vrot.slane %v392, %v400
        %v402 = vlaneseq
        %v403 = vshrl.u32 %v402, 7
        %v404 = vsub.s32 2, %v403
        %v405 = vrot.slane %v392, %v404
        %v406 = vlaneseq
        %v407 = vshrl.u32 %v406, 7
        %v408 = vsub.s32 3, %v407
        %v409 = vrot.slane %v392, %v408
        %v410 = vlaneseq
        %v411 = vshrl.u32 %v410, 7
        %v412 = vsub.s32 4, %v411
        %v413 = vrot.slane %v392, %v412
        %v414 = vlaneseq
        %v415 = vshrl.u32 %v414, 7
        %v416 = vsub.s32 5, %v415
        %v417 = vrot.slane %v392, %v416
        %v418 = vlaneseq
        %v419 = vshrl.u32 %v418, 7
        %v420 = vsub.s32 6, %v419
        %v421 = vrot.slane %v392, %v420
        %v422 = vlaneseq
        %v423 = vshrl.u32 %v422, 7
        %v424 = vsub.s32 7, %v423
        %v425 = vrot.slane %v392, %v424
        %v450 = vunpack.c.l.b16 %v248
        %v451 = vunpack.c.h.b16 %v248
        %v452 = vunpack.c.l.b16 %v249
        %v453 = vunpack.c.h.b16 %v249
        %v454 = vunpack.c.l.b16 %v250
        %v455 = vunpack.c.h.b16 %v250
        %v456 = vunpack.c.l.b16 %v251
        %v457 = vunpack.c.h.b16 %v251
        %v458 = vunpack.c.l.b16 %v252
        %v459 = vunpack.c.h.b16 %v252
        %v460 = vunpack.c.l.b16 %v253
        %v461 = vunpack.c.h.b16 %v253
        %v462 = vunpack.c.l.b16 %v254
        %v463 = vunpack.c.h.b16 %v254
        %v464 = vunpack.c.l.b16 %v255
        %v465 = vunpack.c.h.b16 %v255
        %v466 = vunpack.c.l.b16 %v256
        %v467 = vunpack.c.h.b16 %v256
        %v468 = vunpack.c.l.b16 %v257
        %v469 = vunpack.c.h.b16 %v257
        %v470 = vunpack.c.l.b16 %v258
        %v471 = vunpack.c.h.b16 %v258
        %v472 = vunpack.c.l.b16 %v259
        %v473 = vunpack.c.h.b16 %v259
        %v474 = vunpack.c.l.b16 %v260
        %v475 = vunpack.c.h.b16 %v260
        %v476 = vunpack.c.l.b16 %v261
        %v477 = vunpack.c.h.b16 %v261
        %v478 = vunpack.c.l.b16 %v262
        %v479 = vunpack.c.h.b16 %v262
        %v480 = vunpack.c.l.b16 %v263
        %v481 = vunpack.c.h.b16 %v263
        %v482 = vpack.c.b16 %v452, %v450
        %v483 = vpack.c.b16 %v453, %v451
        %v484 = vpack.c.b16 %v456, %v454
        %v485 = vpack.c.b16 %v457, %v455
        %v486 = vpack.c.b16 %v460, %v458
        %v487 = vpack.c.b16 %v461, %v459
        %v488 = vpack.c.b16 %v464, %v462
        %v489 = vpack.c.b16 %v465, %v463
        %v490 = vpack.c.b16 %v468, %v466
        %v491 = vpack.c.b16 %v469, %v467
        %v492 = vpack.c.b16 %v472, %v470
        %v493 = vpack.c.b16 %v473, %v471
        %v494 = vpack.c.b16 %v476, %v474
        %v495 = vpack.c.b16 %v477, %v475
        %v496 = vpack.c.b16 %v480, %v478
        %v497 = vpack.c.b16 %v481, %v479
        %v642 = vunpack.c.l.b16 %v264
        %v643 = vunpack.c.h.b16 %v264
        %v644 = vunpack.c.l.b16 %v265
        %v645 = vunpack.c.h.b16 %v265
        %v646 = vunpack.c.l.b16 %v266
        %v647 = vunpack.c.h.b16 %v266
        %v648 = vunpack.c.l.b16 %v267
        %v649 = vunpack.c.h.b16 %v267
        %v650 = vunpack.c.l.b16 %v268
        %v651 = vunpack.c.h.b16 %v268
        %v652 = vunpack.c.l.b16 %v269
        %v653 = vunpack.c.h.b16 %v269
        %v654 = vunpack.c.l.b16 %v270
        %v655 = vunpack.c.h.b16 %v270
        %v656 = vunpack.c.l.b16 %v271
        %v657 = vunpack.c.h.b16 %v271
        %v658 = vunpack.c.l.b16 %v272
        %v659 = vunpack.c.h.b16 %v272
        %v660 = vunpack.c.l.b16 %v273
        %v661 = vunpack.c.h.b16 %v273
        %v662 = vunpack.c.l.b16 %v274
        %v663 = vunpack.c.h.b16 %v274
        %v664 = vunpack.c.l.b16 %v275
        %v665 = vunpack.c.h.b16 %v275
        %v666 = vunpack.c.l.b16 %v276
        %v667 = vunpack.c.h.b16 %v276
        %v668 = vunpack.c.l.b16 %v277
        %v669 = vunpack.c.h.b16 %v277
        %v670 = vunpack.c.l.b16 %v278
        %v671 = vunpack.c.h.b16 %v278
        %v672 = vunpack.c.l.b16 %v279
        %v673 = vunpack.c.h.b16 %v279
        %v674 = vunpack.c.l.b16 %v280
        %v675 = vunpack.c.h.b16 %v280
        %v676 = vunpack.c.l.b16 %v281
        %v677 = vunpack.c.h.b16 %v281
        %v678 = vunpack.c.l.b16 %v282
        %v679 = vunpack.c.h.b16 %v282
        %v680 = vunpack.c.l.b16 %v283
        %v681 = vunpack.c.h.b16 %v283
        %v682 = vunpack.c.l.b16 %v284
        %v683 = vunpack.c.h.b16 %v284
        %v684 = vunpack.c.l.b16 %v285
        %v685 = vunpack.c.h.b16 %v285
        %v686 = vunpack.c.l.b16 %v286
        %v687 = vunpack.c.h.b16 %v286
        %v688 = vunpack.c.l.b16 %v287
        %v689 = vunpack.c.h.b16 %v287
        %v690 = vunpack.c.l.b16 %v288
        %v691 = vunpack.c.h.b16 %v288
        %v692 = vunpack.c.l.b16 %v289
        %v693 = vunpack.c.h.b16 %v289
        %v694 = vunpack.c.l.b16 %v290
        %v695 = vunpack.c.h.b16 %v290
        %v696 = vunpack.c.l.b16 %v291
        %v697 = vunpack.c.h.b16 %v291
        %v698 = vunpack.c.l.b16 %v292
        %v699 = vunpack.c.h.b16 %v292
        %v700 = vunpack.c.l.b16 %v293
        %v701 = vunpack.c.h.b16 %v293
        %v702 = vunpack.c.l.b16 %v294
        %v703 = vunpack.c.h.b16 %v294
        %v704 = vunpack.c.l.b16 %v295
        %v705 = vunpack.c.h.b16 %v295
        %v706 = vunpack.c.l.b16 %v296
        %v707 = vunpack.c.h.b16 %v296
        %v708 = vunpack.c.l.b16 %v297
        %v709 = vunpack.c.h.b16 %v297
        %v710 = vunpack.c.l.b16 %v298
        %v711 = vunpack.c.h.b16 %v298
        %v712 = vunpack.c.l.b16 %v299
        %v713 = vunpack.c.h.b16 %v299
        %v714 = vunpack.c.l.b16 %v300
        %v715 = vunpack.c.h.b16 %v300
        %v716 = vunpack.c.l.b16 %v301
        %v717 = vunpack.c.h.b16 %v301
        %v718 = vunpack.c.l.b16 %v302
        %v719 = vunpack.c.h.b16 %v302
        %v720 = vunpack.c.l.b16 %v303
        %v721 = vunpack.c.h.b16 %v303
        %v722 = vunpack.c.l.b16 %v304
        %v723 = vunpack.c.h.b16 %v304
        %v724 = vunpack.c.l.b16 %v305
        %v725 = vunpack.c.h.b16 %v305
        %v726 = vunpack.c.l.b16 %v306
        %v727 = vunpack.c.h.b16 %v306
        %v728 = vunpack.c.l.b16 %v307
        %v729 = vunpack.c.h.b16 %v307
        %v730 = vunpack.c.l.b16 %v308
        %v731 = vunpack.c.h.b16 %v308
        %v732 = vunpack.c.l.b16 %v309
        %v733 = vunpack.c.h.b16 %v309
        %v734 = vunpack.c.l.b16 %v310
        %v735 = vunpack.c.h.b16 %v310
        %v736 = vunpack.c.l.b16 %v311
        %v737 = vunpack.c.h.b16 %v311
        %v738 = vunpack.c.l.b16 %v312
        %v739 = vunpack.c.h.b16 %v312
        %v740 = vunpack.c.l.b16 %v313
        %v741 = vunpack.c.h.b16 %v313
        %v742 = vunpack.c.l.b16 %v314
        %v743 = vunpack.c.h.b16 %v314
        %v744 = vunpack.c.l.b16 %v315
        %v745 = vunpack.c.h.b16 %v315
        %v746 = vunpack.c.l.b16 %v316
        %v747 = vunpack.c.h.b16 %v316
        %v748 = vunpack.c.l.b16 %v317
        %v749 = vunpack.c.h.b16 %v317
        %v750 = vunpack.c.l.b16 %v318
        %v751 = vunpack.c.h.b16 %v318
        %v752 = vunpack.c.l.b16 %v319
        %v753 = vunpack.c.h.b16 %v319
        %v754 = vunpack.c.l.b16 %v320
        %v755 = vunpack.c.h.b16 %v320
        %v756 = vunpack.c.l.b16 %v321
        %v757 = vunpack.c.h.b16 %v321
        %v758 = vunpack.c.l.b16 %v322
        %v759 = vunpack.c.h.b16 %v322
        %v760 = vunpack.c.l.b16 %v323
        %v761 = vunpack.c.h.b16 %v323
        %v762 = vunpack.c.l.b16 %v324
        %v763 = vunpack.c.h.b16 %v324
        %v764 = vunpack.c.l.b16 %v325
        %v765 = vunpack.c.h.b16 %v325
        %v766 = vunpack.c.l.b16 %v326
        %v767 = vunpack.c.h.b16 %v326
        %v768 = vunpack.c.l.b16 %v327
        %v769 = vunpack.c.h.b16 %v327
        %v770 = vunpack.c.l.b16 %v328
        %v771 = vunpack.c.h.b16 %v328
        %v772 = vunpack.c.l.b16 %v329
        %v773 = vunpack.c.h.b16 %v329
        %v774 = vunpack.c.l.b16 %v330
        %v775 = vunpack.c.h.b16 %v330
        %v776 = vunpack.c.l.b16 %v331
        %v777 = vunpack.c.h.b16 %v331
        %v778 = vunpack.c.l.b16 %v332
        %v779 = vunpack.c.h.b16 %v332
        %v780 = vunpack.c.l.b16 %v333
        %v781 = vunpack.c.h.b16 %v333
        %v782 = vunpack.c.l.b16 %v334
        %v783 = vunpack.c.h.b16 %v334
        %v784 = vunpack.c.l.b16 %v335
        %v785 = vunpack.c.h.b16 %v335
        %v786 = vunpack.c.l.b16 %v336
        %v787 = vunpack.c.h.b16 %v336
        %v788 = vunpack.c.l.b16 %v337
        %v789 = vunpack.c.h.b16 %v337
        %v790 = vunpack.c.l.b16 %v338
        %v791 = vunpack.c.h.b16 %v338
        %v792 = vunpack.c.l.b16 %v339
        %v793 = vunpack.c.h.b16 %v339
        %v794 = vunpack.c.l.b16 %v340
        %v795 = vunpack.c.h.b16 %v340
        %v796 = vunpack.c.l.b16 %v341
        %v797 = vunpack.c.h.b16 %v341
        %v798 = vunpack.c.l.b16 %v342
        %v799 = vunpack.c.h.b16 %v342
        %v800 = vunpack.c.l.b16 %v343
        %v801 = vunpack.c.h.b16 %v343
        %v802 = vunpack.c.l.b16 %v344
        %v803 = vunpack.c.h.b16 %v344
        %v804 = vunpack.c.l.b16 %v345
        %v805 = vunpack.c.h.b16 %v345
        %v806 = vunpack.c.l.b16 %v346
        %v807 = vunpack.c.h.b16 %v346
        %v808 = vunpack.c.l.b16 %v347
        %v809 = vunpack.c.h.b16 %v347
        %v810 = vunpack.c.l.b16 %v348
        %v811 = vunpack.c.h.b16 %v348
        %v812 = vunpack.c.l.b16 %v349
        %v813 = vunpack.c.h.b16 %v349
        %v814 = vunpack.c.l.b16 %v350
        %v815 = vunpack.c.h.b16 %v350
        %v816 = vunpack.c.l.b16 %v351
        %v817 = vunpack.c.h.b16 %v351
        %v818 = vunpack.c.l.b16 %v352
        %v819 = vunpack.c.h.b16 %v352
        %v820 = vunpack.c.l.b16 %v353
        %v821 = vunpack.c.h.b16 %v353
        %v822 = vunpack.c.l.b16 %v354
        %v823 = vunpack.c.h.b16 %v354
        %v824 = vunpack.c.l.b16 %v355
        %v825 = vunpack.c.h.b16 %v355
        %v826 = vunpack.c.l.b16 %v356
        %v827 = vunpack.c.h.b16 %v356
        %v828 = vunpack.c.l.b16 %v357
        %v829 = vunpack.c.h.b16 %v357
        %v830 = vunpack.c.l.b16 %v358
        %v831 = vunpack.c.h.b16 %v358
        %v832 = vunpack.c.l.b16 %v359
        %v833 = vunpack.c.h.b16 %v359
        %v834 = vunpack.c.l.b16 %v360
        %v835 = vunpack.c.h.b16 %v360
        %v836 = vunpack.c.l.b16 %v361
        %v837 = vunpack.c.h.b16 %v361
        %v838 = vunpack.c.l.b16 %v362
        %v839 = vunpack.c.h.b16 %v362
        %v840 = vunpack.c.l.b16 %v363
        %v841 = vunpack.c.h.b16 %v363
        %v842 = vunpack.c.l.b16 %v364
        %v843 = vunpack.c.h.b16 %v364
        %v844 = vunpack.c.l.b16 %v365
        %v845 = vunpack.c.h.b16 %v365
        %v846 = vunpack.c.l.b16 %v366
        %v847 = vunpack.c.h.b16 %v366
        %v848 = vunpack.c.l.b16 %v367
        %v849 = vunpack.c.h.b16 %v367
        %v850 = vunpack.c.l.b16 %v368
        %v851 = vunpack.c.h.b16 %v368
        %v852 = vunpack.c.l.b16 %v369
        %v853 = vunpack.c.h.b16 %v369
        %v854 = vunpack.c.l.b16 %v370
        %v855 = vunpack.c.h.b16 %v370
        %v856 = vunpack.c.l.b16 %v371
        %v857 = vunpack.c.h.b16 %v371
        %v858 = vunpack.c.l.b16 %v372
        %v859 = vunpack.c.h.b16 %v372
        %v860 = vunpack.c.l.b16 %v373
        %v861 = vunpack.c.h.b16 %v373
        %v862 = vunpack.c.l.b16 %v374
        %v863 = vunpack.c.h.b16 %v374
        %v864 = vunpack.c.l.b16 %v375
        %v865 = vunpack.c.h.b16 %v375
        %v866 = vunpack.c.l.b16 %v376
        %v867 = vunpack.c.h.b16 %v376
        %v868 = vunpack.c.l.b16 %v377
        %v869 = vunpack.c.h.b16 %v377
        %v870 = vunpack.c.l.b16 %v378
        %v871 = vunpack.c.h.b16 %v378
        %v872 = vunpack.c.l.b16 %v379
        %v873 = vunpack.c.h.b16 %v379
        %v874 = vunpack.c.l.b16 %v380
        %v875 = vunpack.c.h.b16 %v380
        %v876 = vunpack.c.l.b16 %v381
        %v877 = vunpack.c.h.b16 %v381
        %v878 = vunpack.c.l.b16 %v382
        %v879 = vunpack.c.h.b16 %v382
        %v880 = vunpack.c.l.b16 %v383
        %v881 = vunpack.c.h.b16 %v383
        %v882 = vunpack.c.l.b16 %v384
        %v883 = vunpack.c.h.b16 %v384
        %v884 = vunpack.c.l.b16 %v385
        %v885 = vunpack.c.h.b16 %v385
        %v886 = vunpack.c.l.b16 %v386
        %v887 = vunpack.c.h.b16 %v386
        %v888 = vunpack.c.l.b16 %v387
        %v889 = vunpack.c.h.b16 %v387
        %v890 = vunpack.c.l.b16 %v388
        %v891 = vunpack.c.h.b16 %v388
        %v892 = vunpack.c.l.b16 %v389
        %v893 = vunpack.c.h.b16 %v389
        %v894 = vunpack.c.l.b16 %v390
        %v895 = vunpack.c.h.b16 %v390
        %v896 = vunpack.c.l.b16 %v391
        %v897 = vunpack.c.h.b16 %v391
        %v898 = vpack.c.b16 %v650, %v642
        %v899 = vpack.c.b16 %v651, %v643
        %v900 = vpack.c.b16 %v652, %v644
        %v901 = vpack.c.b16 %v653, %v645
        %v902 = vpack.c.b16 %v654, %v646
        %v903 = vpack.c.b16 %v655, %v647
        %v904 = vpack.c.b16 %v656, %v648
        %v905 = vpack.c.b16 %v657, %v649
        %v906 = vpack.c.b16 %v666, %v658
        %v907 = vpack.c.b16 %v667, %v659
        %v908 = vpack.c.b16 %v668, %v660
        %v909 = vpack.c.b16 %v669, %v661
        %v910 = vpack.c.b16 %v670, %v662
        %v911 = vpack.c.b16 %v671, %v663
        %v912 = vpack.c.b16 %v672, %v664
        %v913 = vpack.c.b16 %v673, %v665
        %v914 = vpack.c.b16 %v682, %v674
        %v915 = vpack.c.b16 %v683, %v675
        %v916 = vpack.c.b16 %v684, %v676
        %v917 = vpack.c.b16 %v685, %v677
        %v918 = vpack.c.b16 %v686, %v678
        %v919 = vpack.c.b16 %v687, %v679
        %v920 = vpack.c.b16 %v688, %v680
        %v921 = vpack.c.b16 %v689, %v681
        %v922 = vpack.c.b16 %v698, %v690
        %v923 = vpack.c.b16 %v699, %v691
        %v924 = vpack.c.b16 %v700, %v692
        %v925 = vpack.c.b16 %v701, %v693
        %v926 = vpack.c.b16 %v702, %v694
        %v927 = vpack.c.b16 %v703, %v695
        %v928 = vpack.c.b16 %v704, %v696
        %v929 = vpack.c.b16 %v705, %v697
        %v930 = vpack.c.b16 %v714, %v706
        %v931 = vpack.c.b16 %v715, %v707
        %v932 = vpack.c.b16 %v716, %v708
        %v933 = vpack.c.b16 %v717, %v709
        %v934 = vpack.c.b16 %v718, %v710
        %v935 = vpack.c.b16 %v719, %v711
        %v936 = vpack.c.b16 %v720, %v712
        %v937 = vpack.c.b16 %v721, %v713
        %v938 = vpack.c.b16 %v730, %v722
        %v939 = vpack.c.b16 %v731, %v723
        %v940 = vpack.c.b16 %v732, %v724
        %v941 = vpack.c.b16 %v733, %v725
        %v942 = vpack.c.b16 %v734, %v726
        %v943 = vpack.c.b16 %v735, %v727
        %v944 = vpack.c.b16 %v736, %v728
        %v945 = vpack.c.b16 %v737, %v729
        %v946 = vpack.c.b16 %v746, %v738
        %v947 = vpack.c.b16 %v747, %v739
        %v948 = vpack.c.b16 %v748, %v740
        %v949 = vpack.c.b16 %v749, %v741
        %v950 = vpack.c.b16 %v750, %v742
        %v951 = vpack.c.b16 %v751, %v743
        %v952 = vpack.c.b16 %v752, %v744
        %v953 = vpack.c.b16 %v753, %v745
        %v954 = vpack.c.b16 %v762, %v754
        %v955 = vpack.c.b16 %v763, %v755
        %v956 = vpack.c.b16 %v764, %v756
        %v957 = vpack.c.b16 %v765, %v757
        %v958 = vpack.c.b16 %v766, %v758
        %v959 = vpack.c.b16 %v767, %v759
        %v960 = vpack.c.b16 %v768, %v760
        %v961 = vpack.c.b16 %v769, %v761
        %v962 = vpack.c.b16 %v778, %v770
        %v963 = vpack.c.b16 %v779, %v771
        %v964 = vpack.c.b16 %v780, %v772
        %v965 = vpack.c.b16 %v781, %v773
        %v966 = vpack.c.b16 %v782, %v774
        %v967 = vpack.c.b16 %v783, %v775
        %v968 = vpack.c.b16 %v784, %v776
        %v969 = vpack.c.b16 %v785, %v777
        %v970 = vpack.c.b16 %v794, %v786
        %v971 = vpack.c.b16 %v795, %v787
        %v972 = vpack.c.b16 %v796, %v788
        %v973 = vpack.c.b16 %v797, %v789
        %v974 = vpack.c.b16 %v798, %v790
        %v975 = vpack.c.b16 %v799, %v791
        %v976 = vpack.c.b16 %v800, %v792
        %v977 = vpack.c.b16 %v801, %v793
        %v978 = vpack.c.b16 %v810, %v802
        %v979 = vpack.c.b16 %v811, %v803
        %v980 = vpack.c.b16 %v812, %v804
        %v981 = vpack.c.b16 %v813, %v805
        %v982 = vpack.c.b16 %v814, %v806
        %v983 = vpack.c.b16 %v815, %v807
        %v984 = vpack.c.b16 %v816, %v808
        %v985 = vpack.c.b16 %v817, %v809
        %v986 = vpack.c.b16 %v826, %v818
        %v987 = vpack.c.b16 %v827, %v819
        %v988 = vpack.c.b16 %v828, %v820
        %v989 = vpack.c.b16 %v829, %v821
        %v990 = vpack.c.b16 %v830, %v822
        %v991 = vpack.c.b16 %v831, %v823
        %v992 = vpack.c.b16 %v832, %v824
        %v993 = vpack.c.b16 %v833, %v825
        %v994 = vpack.c.b16 %v842, %v834
        %v995 = vpack.c.b16 %v843, %v835
        %v996 = vpack.c.b16 %v844, %v836
        %v997 = vpack.c.b16 %v845, %v837
        %v998 = vpack.c.b16 %v846, %v838
        %v999 = vpack.c.b16 %v847, %v839
        %v1000 = vpack.c.b16 %v848, %v840
        %v1001 = vpack.c.b16 %v849, %v841
        %v1002 = vpack.c.b16 %v858, %v850
        %v1003 = vpack.c.b16 %v859, %v851
        %v1004 = vpack.c.b16 %v860, %v852
        %v1005 = vpack.c.b16 %v861, %v853
        %v1006 = vpack.c.b16 %v862, %v854
        %v1007 = vpack.c.b16 %v863, %v855
        %v1008 = vpack.c.b16 %v864, %v856
        %v1009 = vpack.c.b16 %v865, %v857
        %v1010 = vpack.c.b16 %v874, %v866
        %v1011 = vpack.c.b16 %v875, %v867
        %v1012 = vpack.c.b16 %v876, %v868
        %v1013 = vpack.c.b16 %v877, %v869
        %v1014 = vpack.c.b16 %v878, %v870
        %v1015 = vpack.c.b16 %v879, %v871
        %v1016 = vpack.c.b16 %v880, %v872
        %v1017 = vpack.c.b16 %v881, %v873
        %v1018 = vpack.c.b16 %v890, %v882
        %v1019 = vpack.c.b16 %v891, %v883
        %v1020 = vpack.c.b16 %v892, %v884
        %v1021 = vpack.c.b16 %v893, %v885
        %v1022 = vpack.c.b16 %v894, %v886
        %v1023 = vpack.c.b16 %v895, %v887
        %v1024 = vpack.c.b16 %v896, %v888
        %v1025 = vpack.c.b16 %v897, %v889
        %1154 = vmatprep.subr.bf16.mxu0 %v899
        %1155 = vmatpush1.bf16.msra.mxu0 %v898
        %1156 = vmatprep.subr.bf16.mxu0 %v907
        %1157 = vmatpush1.bf16.msra.mxu0 %v906
        %1158 = vmatprep.subr.bf16.mxu0 %v915
        %1159 = vmatpush1.bf16.msra.mxu0 %v914
        %1160 = vmatprep.subr.bf16.mxu0 %v923
        %1161 = vmatpush1.bf16.msra.mxu0 %v922
        %1162 = vmatprep.subr.bf16.mxu0 %v931
        %1163 = vmatpush1.bf16.msra.mxu0 %v930
        %1164 = vmatprep.subr.bf16.mxu0 %v939
        %1165 = vmatpush1.bf16.msra.mxu0 %v938
        %1166 = vmatprep.subr.bf16.mxu0 %v947
        %1167 = vmatpush1.bf16.msra.mxu0 %v946
        %1168 = vmatprep.subr.bf16.mxu0 %v955
        %1169 = vmatpush1.bf16.msra.mxu0 %v954
        %1170 = vmatprep.subr.bf16.mxu0 %v963
        %1171 = vmatpush1.bf16.msra.mxu0 %v962
        %1172 = vmatprep.subr.bf16.mxu0 %v971
        %1173 = vmatpush1.bf16.msra.mxu0 %v970
        %1174 = vmatprep.subr.bf16.mxu0 %v979
        %1175 = vmatpush1.bf16.msra.mxu0 %v978
        %1176 = vmatprep.subr.bf16.mxu0 %v987
        %1177 = vmatpush1.bf16.msra.mxu0 %v986
        %1178 = vmatprep.subr.bf16.mxu0 %v995
        %1179 = vmatpush1.bf16.msra.mxu0 %v994
        %1180 = vmatprep.subr.bf16.mxu0 %v1003
        %1181 = vmatpush1.bf16.msra.mxu0 %v1002
        %1182 = vmatprep.subr.bf16.mxu0 %v1011
        %1183 = vmatpush1.bf16.msra.mxu0 %v1010
        %1184 = vmatprep.subr.bf16.mxu0 %v1019
        %1185 = vmatpush1.bf16.msra.mxu0 %v1018
        %1186 = vmatprep.mubr.bf16.mxu0 %v483
        %1187 = vmatmul.mubr.bf16.gmra.mrb[0].mxu0 %v482
        %v1188 = vpop.f32.mrb[0].mxu0
        %v1189 = vadd.f32 %v397, %v1188
        %v1190 = vpop.f32.mrb[0].mxu0
        %v1191 = vadd.f32 %v401, %v1190
        %v1192 = vpop.f32.mrb[0].mxu0
        %v1193 = vadd.f32 %v397, %v1192
        %v1194 = vpop.f32.mrb[0].mxu0
        %v1195 = vadd.f32 %v401, %v1194
        %1196 = vmatprep.mubr.bf16.mxu0 %v485
        %1197 = vmatmul.mubr.bf16.gmra.mrb[0].mxu0 %v484
        %v1198 = vpop.f32.mrb[0].mxu0
        %v1199 = vadd.f32 %v397, %v1198
        %v1200 = vpop.f32.mrb[0].mxu0
        %v1201 = vadd.f32 %v401, %v1200
        %v1202 = vpop.f32.mrb[0].mxu0
        %v1203 = vadd.f32 %v397, %v1202
        %v1204 = vpop.f32.mrb[0].mxu0
        %v1205 = vadd.f32 %v401, %v1204
        %1206 = vmatprep.mubr.bf16.mxu0 %v487
        %1207 = vmatmul.mubr.bf16.gmra.mrb[0].mxu0 %v486
        %v1208 = vpop.f32.mrb[0].mxu0
        %v1209 = vadd.f32 %v397, %v1208
        %v1210 = vpop.f32.mrb[0].mxu0
        %v1211 = vadd.f32 %v401, %v1210
        %v1212 = vpop.f32.mrb[0].mxu0
        %v1213 = vadd.f32 %v397, %v1212
        %v1214 = vpop.f32.mrb[0].mxu0
        %v1215 = vadd.f32 %v401, %v1214
        %1216 = vmatprep.mubr.bf16.mxu0 %v489
        %1217 = vmatmul.mubr.bf16.gmra.mrb[0].mxu0 %v488
        %v1218 = vpop.f32.mrb[0].mxu0
        %v1219 = vadd.f32 %v397, %v1218
        %v1220 = vpop.f32.mrb[0].mxu0
        %v1221 = vadd.f32 %v401, %v1220
        %v1222 = vpop.f32.mrb[0].mxu0
        %v1223 = vadd.f32 %v397, %v1222
        %v1224 = vpop.f32.mrb[0].mxu0
        %v1225 = vadd.f32 %v401, %v1224
        %1226 = vmatprep.mubr.bf16.mxu0 %v491
        %1227 = vmatmul.mubr.bf16.gmra.mrb[0].mxu0 %v490
        %v1228 = vpop.f32.mrb[0].mxu0
        %v1229 = vadd.f32 %v397, %v1228
        %v1230 = vpop.f32.mrb[0].mxu0
        %v1231 = vadd.f32 %v401, %v1230
        %v1232 = vpop.f32.mrb[0].mxu0
        %v1233 = vadd.f32 %v397, %v1232
        %v1234 = vpop.f32.mrb[0].mxu0
        %v1235 = vadd.f32 %v401, %v1234
        %1236 = vmatprep.mubr.bf16.mxu0 %v493
        %1237 = vmatmul.mubr.bf16.gmra.mrb[0].mxu0 %v492
        %v1238 = vpop.f32.mrb[0].mxu0
        %v1239 = vadd.f32 %v397, %v1238
        %v1240 = vpop.f32.mrb[0].mxu0
        %v1241 = vadd.f32 %v401, %v1240
        %v1242 = vpop.f32.mrb[0].mxu0
        %v1243 = vadd.f32 %v397, %v1242
        %v1244 = vpop.f32.mrb[0].mxu0
        %v1245 = vadd.f32 %v401, %v1244
        %1246 = vmatprep.mubr.bf16.mxu0 %v495
        %1247 = vmatmul.mubr.bf16.gmra.mrb[0].mxu0 %v494
        %v1248 = vpop.f32.mrb[0].mxu0
        %v1249 = vadd.f32 %v397, %v1248
        %v1250 = vpop.f32.mrb[0].mxu0
        %v1251 = vadd.f32 %v401, %v1250
        %v1252 = vpop.f32.mrb[0].mxu0
        %v1253 = vadd.f32 %v397, %v1252
        %v1254 = vpop.f32.mrb[0].mxu0
        %v1255 = vadd.f32 %v401, %v1254
        %1256 = vmatprep.mubr.bf16.mxu0 %v497
        %1257 = vmatmul.mubr.bf16.gmra.mrb[0].mxu0 %v496
        %v1258 = vpop.f32.mrb[0].mxu0
        %v1259 = vadd.f32 %v397, %v1258
        %v1260 = vpop.f32.mrb[0].mxu0
        %v1261 = vadd.f32 %v401, %v1260
        %v1262 = vpop.f32.mrb[0].mxu0
        %v1263 = vadd.f32 %v397, %v1262
        %v1264 = vpop.f32.mrb[0].mxu0
        %v1265 = vadd.f32 %v401, %v1264
        %1266 = vdwg.mxu0
        %1267 = vmatprep.subr.bf16.mxu0 %v901
        %1268 = vmatpush1.bf16.msra.mxu0 %v900
        %1269 = vmatprep.subr.bf16.mxu0 %v909
        %1270 = vmatpush1.bf16.msra.mxu0 %v908
        %1271 = vmatprep.subr.bf16.mxu0 %v917
        %1272 = vmatpush1.bf16.msra.mxu0 %v916
        %1273 = vmatprep.subr.bf16.mxu0 %v925
        %1274 = vmatpush1.bf16.msra.mxu0 %v924
        %1275 = vmatprep.subr.bf16.mxu0 %v933
        %1276 = vmatpush1.bf16.msra.mxu0 %v932
        %1277 = vmatprep.subr.bf16.mxu0 %v941
        %1278 = vmatpush1.bf16.msra.mxu0 %v940
        %1279 = vmatprep.subr.bf16.mxu0 %v949
        %1280 = vmatpush1.bf16.msra.mxu0 %v948
        %1281 = vmatprep.subr.bf16.mxu0 %v957
        %1282 = vmatpush1.bf16.msra.mxu0 %v956
        %1283 = vmatprep.subr.bf16.mxu0 %v965
        %1284 = vmatpush1.bf16.msra.mxu0 %v964
        %1285 = vmatprep.subr.bf16.mxu0 %v973
        %1286 = vmatpush1.bf16.msra.mxu0 %v972
        %1287 = vmatprep.subr.bf16.mxu0 %v981
        %1288 = vmatpush1.bf16.msra.mxu0 %v980
        %1289 = vmatprep.subr.bf16.mxu0 %v989
        %1290 = vmatpush1.bf16.msra.mxu0 %v988
        %1291 = vmatprep.subr.bf16.mxu0 %v997
        %1292 = vmatpush1.bf16.msra.mxu0 %v996
        %1293 = vmatprep.subr.bf16.mxu0 %v1005
        %1294 = vmatpush1.bf16.msra.mxu0 %v1004
        %1295 = vmatprep.subr.bf16.mxu0 %v1013
        %1296 = vmatpush1.bf16.msra.mxu0 %v1012
        %1297 = vmatprep.subr.bf16.mxu0 %v1021
        %1298 = vmatpush1.bf16.msra.mxu0 %v1020
        %1299 = vmatprep.mubr.bf16.mxu0 %v483
        %1300 = vmatmul.mubr.bf16.gmra.mrb[0].mxu0 %v482
        %v1301 = vpop.f32.mrb[0].mxu0
        %v1302 = vadd.f32 %v405, %v1301
        %v1303 = vpop.f32.mrb[0].mxu0
        %v1304 = vadd.f32 %v409, %v1303
        %v1305 = vpop.f32.mrb[0].mxu0
        %v1306 = vadd.f32 %v405, %v1305
        %v1307 = vpop.f32.mrb[0].mxu0
        %v1308 = vadd.f32 %v409, %v1307
        %1309 = vmatprep.mubr.bf16.mxu0 %v485
        %1310 = vmatmul.mubr.bf16.gmra.mrb[0].mxu0 %v484
        %v1311 = vpop.f32.mrb[0].mxu0
        %v1312 = vadd.f32 %v405, %v1311
        %v1313 = vpop.f32.mrb[0].mxu0
        %v1314 = vadd.f32 %v409, %v1313
        %v1315 = vpop.f32.mrb[0].mxu0
        %v1316 = vadd.f32 %v405, %v1315
        %v1317 = vpop.f32.mrb[0].mxu0
        %v1318 = vadd.f32 %v409, %v1317
        %1319 = vmatprep.mubr.bf16.mxu0 %v487
        %1320 = vmatmul.mubr.bf16.gmra.mrb[0].mxu0 %v486
        %v1321 = vpop.f32.mrb[0].mxu0
        %v1322 = vadd.f32 %v405, %v1321
        %v1323 = vpop.f32.mrb[0].mxu0
        %v1324 = vadd.f32 %v409, %v1323
        %v1325 = vpop.f32.mrb[0].mxu0
        %v1326 = vadd.f32 %v405, %v1325
        %v1327 = vpop.f32.mrb[0].mxu0
        %v1328 = vadd.f32 %v409, %v1327
        %1329 = vmatprep.mubr.bf16.mxu0 %v489
        %1330 = vmatmul.mubr.bf16.gmra.mrb[0].mxu0 %v488
        %v1331 = vpop.f32.mrb[0].mxu0
        %v1332 = vadd.f32 %v405, %v1331
        %v1333 = vpop.f32.mrb[0].mxu0
        %v1334 = vadd.f32 %v409, %v1333
        %v1335 = vpop.f32.mrb[0].mxu0
        %v1336 = vadd.f32 %v405, %v1335
        %v1337 = vpop.f32.mrb[0].mxu0
        %v1338 = vadd.f32 %v409, %v1337
        %1339 = vmatprep.mubr.bf16.mxu0 %v491
        %1340 = vmatmul.mubr.bf16.gmra.mrb[0].mxu0 %v490
        %v1341 = vpop.f32.mrb[0].mxu0
        %v1342 = vadd.f32 %v405, %v1341
        %v1343 = vpop.f32.mrb[0].mxu0
        %v1344 = vadd.f32 %v409, %v1343
        %v1345 = vpop.f32.mrb[0].mxu0
        %v1346 = vadd.f32 %v405, %v1345
        %v1347 = vpop.f32.mrb[0].mxu0
        %v1348 = vadd.f32 %v409, %v1347
        %1349 = vmatprep.mubr.bf16.mxu0 %v493
        %1350 = vmatmul.mubr.bf16.gmra.mrb[0].mxu0 %v492
        %v1351 = vpop.f32.mrb[0].mxu0
        %v1352 = vadd.f32 %v405, %v1351
        %v1353 = vpop.f32.mrb[0].mxu0
        %v1354 = vadd.f32 %v409, %v1353
        %v1355 = vpop.f32.mrb[0].mxu0
        %v1356 = vadd.f32 %v405, %v1355
        %v1357 = vpop.f32.mrb[0].mxu0
        %v1358 = vadd.f32 %v409, %v1357
        %1359 = vmatprep.mubr.bf16.mxu0 %v495
        %1360 = vmatmul.mubr.bf16.gmra.mrb[0].mxu0 %v494
        %v1361 = vpop.f32.mrb[0].mxu0
        %v1362 = vadd.f32 %v405, %v1361
        %v1363 = vpop.f32.mrb[0].mxu0
        %v1364 = vadd.f32 %v409, %v1363
        %v1365 = vpop.f32.mrb[0].mxu0
        %v1366 = vadd.f32 %v405, %v1365
        %v1367 = vpop.f32.mrb[0].mxu0
        %v1368 = vadd.f32 %v409, %v1367
        %1369 = vmatprep.mubr.bf16.mxu0 %v497
        %1370 = vmatmul.mubr.bf16.gmra.mrb[0].mxu0 %v496
        %v1371 = vpop.f32.mrb[0].mxu0
        %v1372 = vadd.f32 %v405, %v1371
        %v1373 = vpop.f32.mrb[0].mxu0
        %v1374 = vadd.f32 %v409, %v1373
        %v1375 = vpop.f32.mrb[0].mxu0
        %v1376 = vadd.f32 %v405, %v1375
        %v1377 = vpop.f32.mrb[0].mxu0
        %v1378 = vadd.f32 %v409, %v1377
        %1379 = vdwg.mxu0
        %1380 = vmatprep.subr.bf16.mxu0 %v903
        %1381 = vmatpush1.bf16.msra.mxu0 %v902
        %1382 = vmatprep.subr.bf16.mxu0 %v911
        %1383 = vmatpush1.bf16.msra.mxu0 %v910
        %1384 = vmatprep.subr.bf16.mxu0 %v919
        %1385 = vmatpush1.bf16.msra.mxu0 %v918
        %1386 = vmatprep.subr.bf16.mxu0 %v927
        %1387 = vmatpush1.bf16.msra.mxu0 %v926
        %1388 = vmatprep.subr.bf16.mxu0 %v935
        %1389 = vmatpush1.bf16.msra.mxu0 %v934
        %1390 = vmatprep.subr.bf16.mxu0 %v943
        %1391 = vmatpush1.bf16.msra.mxu0 %v942
        %1392 = vmatprep.subr.bf16.mxu0 %v951
        %1393 = vmatpush1.bf16.msra.mxu0 %v950
        %1394 = vmatprep.subr.bf16.mxu0 %v959
        %1395 = vmatpush1.bf16.msra.mxu0 %v958
        %1396 = vmatprep.subr.bf16.mxu0 %v967
        %1397 = vmatpush1.bf16.msra.mxu0 %v966
        %1398 = vmatprep.subr.bf16.mxu0 %v975
        %1399 = vmatpush1.bf16.msra.mxu0 %v974
        %1400 = vmatprep.subr.bf16.mxu0 %v983
        %1401 = vmatpush1.bf16.msra.mxu0 %v982
        %1402 = vmatprep.subr.bf16.mxu0 %v991
        %1403 = vmatpush1.bf16.msra.mxu0 %v990
        %1404 = vmatprep.subr.bf16.mxu0 %v999
        %1405 = vmatpush1.bf16.msra.mxu0 %v998
        %1406 = vmatprep.subr.bf16.mxu0 %v1007
        %1407 = vmatpush1.bf16.msra.mxu0 %v1006
        %1408 = vmatprep.subr.bf16.mxu0 %v1015
        %1409 = vmatpush1.bf16.msra.mxu0 %v1014
        %1410 = vmatprep.subr.bf16.mxu0 %v1023
        %1411 = vmatpush1.bf16.msra.mxu0 %v1022
        %1412 = vmatprep.mubr.bf16.mxu0 %v483
        %1413 = vmatmul.mubr.bf16.gmra.mrb[0].mxu0 %v482
        %v1414 = vpop.f32.mrb[0].mxu0
        %v1415 = vadd.f32 %v413, %v1414
        %v1416 = vpop.f32.mrb[0].mxu0
        %v1417 = vadd.f32 %v417, %v1416
        %v1418 = vpop.f32.mrb[0].mxu0
        %v1419 = vadd.f32 %v413, %v1418
        %v1420 = vpop.f32.mrb[0].mxu0
        %v1421 = vadd.f32 %v417, %v1420
        %1422 = vmatprep.mubr.bf16.mxu0 %v485
        %1423 = vmatmul.mubr.bf16.gmra.mrb[0].mxu0 %v484
        %v1424 = vpop.f32.mrb[0].mxu0
        %v1425 = vadd.f32 %v413, %v1424
        %v1426 = vpop.f32.mrb[0].mxu0
        %v1427 = vadd.f32 %v417, %v1426
        %v1428 = vpop.f32.mrb[0].mxu0
        %v1429 = vadd.f32 %v413, %v1428
        %v1430 = vpop.f32.mrb[0].mxu0
        %v1431 = vadd.f32 %v417, %v1430
        %1432 = vmatprep.mubr.bf16.mxu0 %v487
        %1433 = vmatmul.mubr.bf16.gmra.mrb[0].mxu0 %v486
        %v1434 = vpop.f32.mrb[0].mxu0
        %v1435 = vadd.f32 %v413, %v1434
        %v1436 = vpop.f32.mrb[0].mxu0
        %v1437 = vadd.f32 %v417, %v1436
        %v1438 = vpop.f32.mrb[0].mxu0
        %v1439 = vadd.f32 %v413, %v1438
        %v1440 = vpop.f32.mrb[0].mxu0
        %v1441 = vadd.f32 %v417, %v1440
        %1442 = vmatprep.mubr.bf16.mxu0 %v489
        %1443 = vmatmul.mubr.bf16.gmra.mrb[0].mxu0 %v488
        %v1444 = vpop.f32.mrb[0].mxu0
        %v1445 = vadd.f32 %v413, %v1444
        %v1446 = vpop.f32.mrb[0].mxu0
        %v1447 = vadd.f32 %v417, %v1446
        %v1448 = vpop.f32.mrb[0].mxu0
        %v1449 = vadd.f32 %v413, %v1448
        %v1450 = vpop.f32.mrb[0].mxu0
        %v1451 = vadd.f32 %v417, %v1450
        %1452 = vmatprep.mubr.bf16.mxu0 %v491
        %1453 = vmatmul.mubr.bf16.gmra.mrb[0].mxu0 %v490
        %v1454 = vpop.f32.mrb[0].mxu0
        %v1455 = vadd.f32 %v413, %v1454
        %v1456 = vpop.f32.mrb[0].mxu0
        %v1457 = vadd.f32 %v417, %v1456
        %v1458 = vpop.f32.mrb[0].mxu0
        %v1459 = vadd.f32 %v413, %v1458
        %v1460 = vpop.f32.mrb[0].mxu0
        %v1461 = vadd.f32 %v417, %v1460
        %1462 = vmatprep.mubr.bf16.mxu0 %v493
        %1463 = vmatmul.mubr.bf16.gmra.mrb[0].mxu0 %v492
        %v1464 = vpop.f32.mrb[0].mxu0
        %v1465 = vadd.f32 %v413, %v1464
        %v1466 = vpop.f32.mrb[0].mxu0
        %v1467 = vadd.f32 %v417, %v1466
        %v1468 = vpop.f32.mrb[0].mxu0
        %v1469 = vadd.f32 %v413, %v1468
        %v1470 = vpop.f32.mrb[0].mxu0
        %v1471 = vadd.f32 %v417, %v1470
        %1472 = vmatprep.mubr.bf16.mxu0 %v495
        %1473 = vmatmul.mubr.bf16.gmra.mrb[0].mxu0 %v494
        %v1474 = vpop.f32.mrb[0].mxu0
        %v1475 = vadd.f32 %v413, %v1474
        %v1476 = vpop.f32.mrb[0].mxu0
        %v1477 = vadd.f32 %v417, %v1476
        %v1478 = vpop.f32.mrb[0].mxu0
        %v1479 = vadd.f32 %v413, %v1478
        %v1480 = vpop.f32.mrb[0].mxu0
        %v1481 = vadd.f32 %v417, %v1480
        %1482 = vmatprep.mubr.bf16.mxu0 %v497
        %1483 = vmatmul.mubr.bf16.gmra.mrb[0].mxu0 %v496
        %v1484 = vpop.f32.mrb[0].mxu0
        %v1485 = vadd.f32 %v413, %v1484
        %v1486 = vpop.f32.mrb[0].mxu0
        %v1487 = vadd.f32 %v417, %v1486
        %v1488 = vpop.f32.mrb[0].mxu0
        %v1489 = vadd.f32 %v413, %v1488
        %v1490 = vpop.f32.mrb[0].mxu0
        %v1491 = vadd.f32 %v417, %v1490
        %1492 = vdwg.mxu0
        %1493 = vmatprep.subr.bf16.mxu0 %v905
        %1494 = vmatpush1.bf16.msra.mxu0 %v904
        %1495 = vmatprep.subr.bf16.mxu0 %v913
        %1496 = vmatpush1.bf16.msra.mxu0 %v912
        %1497 = vmatprep.subr.bf16.mxu0 %v921
        %1498 = vmatpush1.bf16.msra.mxu0 %v920
        %1499 = vmatprep.subr.bf16.mxu0 %v929
        %1500 = vmatpush1.bf16.msra.mxu0 %v928
        %1501 = vmatprep.subr.bf16.mxu0 %v937
        %1502 = vmatpush1.bf16.msra.mxu0 %v936
        %1503 = vmatprep.subr.bf16.mxu0 %v945
        %1504 = vmatpush1.bf16.msra.mxu0 %v944
        %1505 = vmatprep.subr.bf16.mxu0 %v953
        %1506 = vmatpush1.bf16.msra.mxu0 %v952
        %1507 = vmatprep.subr.bf16.mxu0 %v961
        %1508 = vmatpush1.bf16.msra.mxu0 %v960
        %1509 = vmatprep.subr.bf16.mxu0 %v969
        %1510 = vmatpush1.bf16.msra.mxu0 %v968
        %1511 = vmatprep.subr.bf16.mxu0 %v977
        %1512 = vmatpush1.bf16.msra.mxu0 %v976
        %1513 = vmatprep.subr.bf16.mxu0 %v985
        %1514 = vmatpush1.bf16.msra.mxu0 %v984
        %1515 = vmatprep.subr.bf16.mxu0 %v993
        %1516 = vmatpush1.bf16.msra.mxu0 %v992
        %1517 = vmatprep.subr.bf16.mxu0 %v1001
        %1518 = vmatpush1.bf16.msra.mxu0 %v1000
        %1519 = vmatprep.subr.bf16.mxu0 %v1009
        %1520 = vmatpush1.bf16.msra.mxu0 %v1008
        %1521 = vmatprep.subr.bf16.mxu0 %v1017
        %1522 = vmatpush1.bf16.msra.mxu0 %v1016
        %1523 = vmatprep.subr.bf16.mxu0 %v1025
        %1524 = vmatpush1.bf16.msra.mxu0 %v1024
        %1525 = vmatprep.mubr.bf16.mxu0 %v483
        %1526 = vmatmul.mubr.bf16.gmra.mrb[0].mxu0 %v482
        %v1527 = vpop.f32.mrb[0].mxu0
        %v1528 = vadd.f32 %v421, %v1527
        %v1529 = vpop.f32.mrb[0].mxu0
        %v1530 = vadd.f32 %v425, %v1529
        %v1531 = vpop.f32.mrb[0].mxu0
        %v1532 = vadd.f32 %v421, %v1531
        %v1533 = vpop.f32.mrb[0].mxu0
        %v1534 = vadd.f32 %v425, %v1533
        %1535 = vmatprep.mubr.bf16.mxu0 %v485
        %1536 = vmatmul.mubr.bf16.gmra.mrb[0].mxu0 %v484
        %v1537 = vpop.f32.mrb[0].mxu0
        %v1538 = vadd.f32 %v421, %v1537
        %v1539 = vpop.f32.mrb[0].mxu0
        %v1540 = vadd.f32 %v425, %v1539
        %v1541 = vpop.f32.mrb[0].mxu0
        %v1542 = vadd.f32 %v421, %v1541
        %v1543 = vpop.f32.mrb[0].mxu0
        %v1544 = vadd.f32 %v425, %v1543
        %1545 = vmatprep.mubr.bf16.mxu0 %v487
        %1546 = vmatmul.mubr.bf16.gmra.mrb[0].mxu0 %v486
        %v1547 = vpop.f32.mrb[0].mxu0
        %v1548 = vadd.f32 %v421, %v1547
        %v1549 = vpop.f32.mrb[0].mxu0
        %v1550 = vadd.f32 %v425, %v1549
        %v1551 = vpop.f32.mrb[0].mxu0
        %v1552 = vadd.f32 %v421, %v1551
        %v1553 = vpop.f32.mrb[0].mxu0
        %v1554 = vadd.f32 %v425, %v1553
        %1555 = vmatprep.mubr.bf16.mxu0 %v489
        %1556 = vmatmul.mubr.bf16.gmra.mrb[0].mxu0 %v488
        %v1557 = vpop.f32.mrb[0].mxu0
        %v1558 = vadd.f32 %v421, %v1557
        %v1559 = vpop.f32.mrb[0].mxu0
        %v1560 = vadd.f32 %v425, %v1559
        %v1561 = vpop.f32.mrb[0].mxu0
        %v1562 = vadd.f32 %v421, %v1561
        %v1563 = vpop.f32.mrb[0].mxu0
        %v1564 = vadd.f32 %v425, %v1563
        %1565 = vmatprep.mubr.bf16.mxu0 %v491
        %1566 = vmatmul.mubr.bf16.gmra.mrb[0].mxu0 %v490
        %v1567 = vpop.f32.mrb[0].mxu0
        %v1568 = vadd.f32 %v421, %v1567
        %v1569 = vpop.f32.mrb[0].mxu0
        %v1570 = vadd.f32 %v425, %v1569
        %v1571 = vpop.f32.mrb[0].mxu0
        %v1572 = vadd.f32 %v421, %v1571
        %v1573 = vpop.f32.mrb[0].mxu0
        %v1574 = vadd.f32 %v425, %v1573
        %1575 = vmatprep.mubr.bf16.mxu0 %v493
        %1576 = vmatmul.mubr.bf16.gmra.mrb[0].mxu0 %v492
        %v1577 = vpop.f32.mrb[0].mxu0
        %v1578 = vadd.f32 %v421, %v1577
        %v1579 = vpop.f32.mrb[0].mxu0
        %v1580 = vadd.f32 %v425, %v1579
        %v1581 = vpop.f32.mrb[0].mxu0
        %v1582 = vadd.f32 %v421, %v1581
        %v1583 = vpop.f32.mrb[0].mxu0
        %v1584 = vadd.f32 %v425, %v1583
        %1585 = vmatprep.mubr.bf16.mxu0 %v495
        %1586 = vmatmul.mubr.bf16.gmra.mrb[0].mxu0 %v494
        %v1587 = vpop.f32.mrb[0].mxu0
        %v1588 = vadd.f32 %v421, %v1587
        %v1589 = vpop.f32.mrb[0].mxu0
        %v1590 = vadd.f32 %v425, %v1589
        %v1591 = vpop.f32.mrb[0].mxu0
        %v1592 = vadd.f32 %v421, %v1591
        %v1593 = vpop.f32.mrb[0].mxu0
        %v1594 = vadd.f32 %v425, %v1593
        %1595 = vmatprep.mubr.bf16.mxu0 %v497
        %1596 = vmatmul.mubr.bf16.gmra.mrb[0].mxu0 %v496
        %v1597 = vpop.f32.mrb[0].mxu0
        %v1598 = vadd.f32 %v421, %v1597
        %v1599 = vpop.f32.mrb[0].mxu0
        %v1600 = vadd.f32 %v425, %v1599
        %v1601 = vpop.f32.mrb[0].mxu0
        %v1602 = vadd.f32 %v421, %v1601
        %v1603 = vpop.f32.mrb[0].mxu0
        %v1604 = vadd.f32 %v425, %v1603
        %1605 = vdwg.mxu0
        %v1606 = vmax.f32 %v1189, 0.0
        %v1607 = vmax.f32 %v1191, 0.0
        %v1608 = vmax.f32 %v1302, 0.0
        %v1609 = vmax.f32 %v1304, 0.0
        %v1610 = vmax.f32 %v1415, 0.0
        %v1611 = vmax.f32 %v1417, 0.0
        %v1612 = vmax.f32 %v1528, 0.0
        %v1613 = vmax.f32 %v1530, 0.0
        %v1614 = vmax.f32 %v1193, 0.0
        %v1615 = vmax.f32 %v1195, 0.0
        %v1616 = vmax.f32 %v1306, 0.0
        %v1617 = vmax.f32 %v1308, 0.0
        %v1618 = vmax.f32 %v1419, 0.0
        %v1619 = vmax.f32 %v1421, 0.0
        %v1620 = vmax.f32 %v1532, 0.0
        %v1621 = vmax.f32 %v1534, 0.0
        %v1622 = vmax.f32 %v1199, 0.0
        %v1623 = vmax.f32 %v1201, 0.0
        %v1624 = vmax.f32 %v1312, 0.0
        %v1625 = vmax.f32 %v1314, 0.0
        %v1626 = vmax.f32 %v1425, 0.0
        %v1627 = vmax.f32 %v1427, 0.0
        %v1628 = vmax.f32 %v1538, 0.0
        %v1629 = vmax.f32 %v1540, 0.0
        %v1630 = vmax.f32 %v1203, 0.0
        %v1631 = vmax.f32 %v1205, 0.0
        %v1632 = vmax.f32 %v1316, 0.0
        %v1633 = vmax.f32 %v1318, 0.0
        %v1634 = vmax.f32 %v1429, 0.0
        %v1635 = vmax.f32 %v1431, 0.0
        %v1636 = vmax.f32 %v1542, 0.0
        %v1637 = vmax.f32 %v1544, 0.0
        %v1638 = vmax.f32 %v1209, 0.0
        %v1639 = vmax.f32 %v1211, 0.0
        %v1640 = vmax.f32 %v1322, 0.0
        %v1641 = vmax.f32 %v1324, 0.0
        %v1642 = vmax.f32 %v1435, 0.0
        %v1643 = vmax.f32 %v1437, 0.0
        %v1644 = vmax.f32 %v1548, 0.0
        %v1645 = vmax.f32 %v1550, 0.0
        %v1646 = vmax.f32 %v1213, 0.0
        %v1647 = vmax.f32 %v1215, 0.0
        %v1648 = vmax.f32 %v1326, 0.0
        %v1649 = vmax.f32 %v1328, 0.0
        %v1650 = vmax.f32 %v1439, 0.0
        %v1651 = vmax.f32 %v1441, 0.0
        %v1652 = vmax.f32 %v1552, 0.0
        %v1653 = vmax.f32 %v1554, 0.0
        %v1654 = vmax.f32 %v1219, 0.0
        %v1655 = vmax.f32 %v1221, 0.0
        %v1656 = vmax.f32 %v1332, 0.0
        %v1657 = vmax.f32 %v1334, 0.0
        %v1658 = vmax.f32 %v1445, 0.0
        %v1659 = vmax.f32 %v1447, 0.0
        %v1660 = vmax.f32 %v1558, 0.0
        %v1661 = vmax.f32 %v1560, 0.0
        %v1662 = vmax.f32 %v1223, 0.0
        %v1663 = vmax.f32 %v1225, 0.0
        %v1664 = vmax.f32 %v1336, 0.0
        %v1665 = vmax.f32 %v1338, 0.0
        %v1666 = vmax.f32 %v1449, 0.0
        %v1667 = vmax.f32 %v1451, 0.0
        %v1668 = vmax.f32 %v1562, 0.0
        %v1669 = vmax.f32 %v1564, 0.0
        %v1670 = vmax.f32 %v1229, 0.0
        %v1671 = vmax.f32 %v1231, 0.0
        %v1672 = vmax.f32 %v1342, 0.0
        %v1673 = vmax.f32 %v1344, 0.0
        %v1674 = vmax.f32 %v1455, 0.0
        %v1675 = vmax.f32 %v1457, 0.0
        %v1676 = vmax.f32 %v1568, 0.0
        %v1677 = vmax.f32 %v1570, 0.0
        %v1678 = vmax.f32 %v1233, 0.0
        %v1679 = vmax.f32 %v1235, 0.0
        %v1680 = vmax.f32 %v1346, 0.0
        %v1681 = vmax.f32 %v1348, 0.0
        %v1682 = vmax.f32 %v1459, 0.0
        %v1683 = vmax.f32 %v1461, 0.0
        %v1684 = vmax.f32 %v1572, 0.0
        %v1685 = vmax.f32 %v1574, 0.0
        %v1686 = vmax.f32 %v1239, 0.0
        %v1687 = vmax.f32 %v1241, 0.0
        %v1688 = vmax.f32 %v1352, 0.0
        %v1689 = vmax.f32 %v1354, 0.0
        %v1690 = vmax.f32 %v1465, 0.0
        %v1691 = vmax.f32 %v1467, 0.0
        %v1692 = vmax.f32 %v1578, 0.0
        %v1693 = vmax.f32 %v1580, 0.0
        %v1694 = vmax.f32 %v1243, 0.0
        %v1695 = vmax.f32 %v1245, 0.0
        %v1696 = vmax.f32 %v1356, 0.0
        %v1697 = vmax.f32 %v1358, 0.0
        %v1698 = vmax.f32 %v1469, 0.0
        %v1699 = vmax.f32 %v1471, 0.0
        %v1700 = vmax.f32 %v1582, 0.0
        %v1701 = vmax.f32 %v1584, 0.0
        %v1702 = vmax.f32 %v1249, 0.0
        %v1703 = vmax.f32 %v1251, 0.0
        %v1704 = vmax.f32 %v1362, 0.0
        %v1705 = vmax.f32 %v1364, 0.0
        %v1706 = vmax.f32 %v1475, 0.0
        %v1707 = vmax.f32 %v1477, 0.0
        %v1708 = vmax.f32 %v1588, 0.0
        %v1709 = vmax.f32 %v1590, 0.0
        %v1710 = vmax.f32 %v1253, 0.0
        %v1711 = vmax.f32 %v1255, 0.0
        %v1712 = vmax.f32 %v1366, 0.0
        %v1713 = vmax.f32 %v1368, 0.0
        %v1714 = vmax.f32 %v1479, 0.0
        %v1715 = vmax.f32 %v1481, 0.0
        %v1716 = vmax.f32 %v1592, 0.0
        %v1717 = vmax.f32 %v1594, 0.0
        %v1718 = vmax.f32 %v1259, 0.0
        %v1719 = vmax.f32 %v1261, 0.0
        %v1720 = vmax.f32 %v1372, 0.0
        %v1721 = vmax.f32 %v1374, 0.0
        %v1722 = vmax.f32 %v1485, 0.0
        %v1723 = vmax.f32 %v1487, 0.0
        %v1724 = vmax.f32 %v1598, 0.0
        %v1725 = vmax.f32 %v1600, 0.0
        %v1726 = vmax.f32 %v1263, 0.0
        %v1727 = vmax.f32 %v1265, 0.0
        %v1728 = vmax.f32 %v1376, 0.0
        %v1729 = vmax.f32 %v1378, 0.0
        %v1730 = vmax.f32 %v1489, 0.0
        %v1731 = vmax.f32 %v1491, 0.0
        %v1732 = vmax.f32 %v1602, 0.0
        %v1733 = vmax.f32 %v1604, 0.0
        %v1734 = vpack.c.bf16 %v1614, %v1606
        %v1735 = vpack.c.bf16 %v1615, %v1607
        %v1736 = vpack.c.bf16 %v1616, %v1608
        %v1737 = vpack.c.bf16 %v1617, %v1609
        %v1738 = vpack.c.bf16 %v1618, %v1610
        %v1739 = vpack.c.bf16 %v1619, %v1611
        %v1740 = vpack.c.bf16 %v1620, %v1612
        %v1741 = vpack.c.bf16 %v1621, %v1613
        %v1742 = vpack.c.bf16 %v1630, %v1622
        %v1743 = vpack.c.bf16 %v1631, %v1623
        %v1744 = vpack.c.bf16 %v1632, %v1624
        %v1745 = vpack.c.bf16 %v1633, %v1625
        %v1746 = vpack.c.bf16 %v1634, %v1626
        %v1747 = vpack.c.bf16 %v1635, %v1627
        %v1748 = vpack.c.bf16 %v1636, %v1628
        %v1749 = vpack.c.bf16 %v1637, %v1629
        %v1750 = vpack.c.bf16 %v1646, %v1638
        %v1751 = vpack.c.bf16 %v1647, %v1639
        %v1752 = vpack.c.bf16 %v1648, %v1640
        %v1753 = vpack.c.bf16 %v1649, %v1641
        %v1754 = vpack.c.bf16 %v1650, %v1642
        %v1755 = vpack.c.bf16 %v1651, %v1643
        %v1756 = vpack.c.bf16 %v1652, %v1644
        %v1757 = vpack.c.bf16 %v1653, %v1645
        %v1758 = vpack.c.bf16 %v1662, %v1654
        %v1759 = vpack.c.bf16 %v1663, %v1655
        %v1760 = vpack.c.bf16 %v1664, %v1656
        %v1761 = vpack.c.bf16 %v1665, %v1657
        %v1762 = vpack.c.bf16 %v1666, %v1658
        %v1763 = vpack.c.bf16 %v1667, %v1659
        %v1764 = vpack.c.bf16 %v1668, %v1660
        %v1765 = vpack.c.bf16 %v1669, %v1661
        %v1766 = vpack.c.bf16 %v1678, %v1670
        %v1767 = vpack.c.bf16 %v1679, %v1671
        %v1768 = vpack.c.bf16 %v1680, %v1672
        %v1769 = vpack.c.bf16 %v1681, %v1673
        %v1770 = vpack.c.bf16 %v1682, %v1674
        %v1771 = vpack.c.bf16 %v1683, %v1675
        %v1772 = vpack.c.bf16 %v1684, %v1676
        %v1773 = vpack.c.bf16 %v1685, %v1677
        %v1774 = vpack.c.bf16 %v1694, %v1686
        %v1775 = vpack.c.bf16 %v1695, %v1687
        %v1776 = vpack.c.bf16 %v1696, %v1688
        %v1777 = vpack.c.bf16 %v1697, %v1689
        %v1778 = vpack.c.bf16 %v1698, %v1690
        %v1779 = vpack.c.bf16 %v1699, %v1691
        %v1780 = vpack.c.bf16 %v1700, %v1692
        %v1781 = vpack.c.bf16 %v1701, %v1693
        %v1782 = vpack.c.bf16 %v1710, %v1702
        %v1783 = vpack.c.bf16 %v1711, %v1703
        %v1784 = vpack.c.bf16 %v1712, %v1704
        %v1785 = vpack.c.bf16 %v1713, %v1705
        %v1786 = vpack.c.bf16 %v1714, %v1706
        %v1787 = vpack.c.bf16 %v1715, %v1707
        %v1788 = vpack.c.bf16 %v1716, %v1708
        %v1789 = vpack.c.bf16 %v1717, %v1709
        %v1790 = vpack.c.bf16 %v1726, %v1718
        %v1791 = vpack.c.bf16 %v1727, %v1719
        %v1792 = vpack.c.bf16 %v1728, %v1720
        %v1793 = vpack.c.bf16 %v1729, %v1721
        %v1794 = vpack.c.bf16 %v1730, %v1722
        %v1795 = vpack.c.bf16 %v1731, %v1723
        %v1796 = vpack.c.bf16 %v1732, %v1724
        %v1797 = vpack.c.bf16 %v1733, %v1725
        %v1798 = vld [vmem:[#allocation2] sm:$0xff]
        %v1799 = vld [vmem:[#allocation2 + $0x8] sm:$0xff]
        %v1800 = vld [vmem:[#allocation2 + $0x10] sm:$0xff]
        %v1801 = vld [vmem:[#allocation2 + $0x18] sm:$0xff]
        %v1802 = vld [vmem:[#allocation2 + $0x20] sm:$0xff]
        %v1803 = vld [vmem:[#allocation2 + $0x28] sm:$0xff]
        %v1804 = vld [vmem:[#allocation2 + $0x30] sm:$0xff]
        %v1805 = vld [vmem:[#allocation2 + $0x38] sm:$0xff]
        %v1806 = vld [vmem:[#allocation2 + $0x40] sm:$0xff]
        %v1807 = vld [vmem:[#allocation2 + $0x48] sm:$0xff]
        %v1808 = vld [vmem:[#allocation2 + $0x50] sm:$0xff]
        %v1809 = vld [vmem:[#allocation2 + $0x58] sm:$0xff]
        %v1810 = vld [vmem:[#allocation2 + $0x60] sm:$0xff]
        %v1811 = vld [vmem:[#allocation2 + $0x68] sm:$0xff]
        %v1812 = vld [vmem:[#allocation2 + $0x70] sm:$0xff]
        %v1813 = vld [vmem:[#allocation2 + $0x78] sm:$0xff]
        %v1814 = vld [vmem:[#allocation2 + $0x80] sm:$0xff]
        %v1815 = vld [vmem:[#allocation2 + $0x88] sm:$0xff]
        %v1816 = vld [vmem:[#allocation2 + $0x90] sm:$0xff]
        %v1817 = vld [vmem:[#allocation2 + $0x98] sm:$0xff]
        %v1818 = vld [vmem:[#allocation2 + $0xa0] sm:$0xff]
        %v1819 = vld [vmem:[#allocation2 + $0xa8] sm:$0xff]
        %v1820 = vld [vmem:[#allocation2 + $0xb0] sm:$0xff]
        %v1821 = vld [vmem:[#allocation2 + $0xb8] sm:$0xff]
        %v1822 = vld [vmem:[#allocation2 + $0xc0] sm:$0xff]
        %v1823 = vld [vmem:[#allocation2 + $0xc8] sm:$0xff]
        %v1824 = vld [vmem:[#allocation2 + $0xd0] sm:$0xff]
        %v1825 = vld [vmem:[#allocation2 + $0xd8] sm:$0xff]
        %v1826 = vld [vmem:[#allocation2 + $0xe0] sm:$0xff]
        %v1827 = vld [vmem:[#allocation2 + $0xe8] sm:$0xff]
        %v1828 = vld [vmem:[#allocation2 + $0xf0] sm:$0xff]
        %v1829 = vld [vmem:[#allocation2 + $0xf8] sm:$0xff]
        %v1830 = vld [vmem:[#allocation2 + $0x100] sm:$0xff]
        %v1831 = vld [vmem:[#allocation2 + $0x108] sm:$0xff]
        %v1832 = vld [vmem:[#allocation2 + $0x110] sm:$0xff]
        %v1833 = vld [vmem:[#allocation2 + $0x118] sm:$0xff]
        %v1834 = vld [vmem:[#allocation2 + $0x120] sm:$0xff]
        %v1835 = vld [vmem:[#allocation2 + $0x128] sm:$0xff]
        %v1836 = vld [vmem:[#allocation2 + $0x130] sm:$0xff]
        %v1837 = vld [vmem:[#allocation2 + $0x138] sm:$0xff]
        %v1838 = vld [vmem:[#allocation2 + $0x140] sm:$0xff]
        %v1839 = vld [vmem:[#allocation2 + $0x148] sm:$0xff]
        %v1840 = vld [vmem:[#allocation2 + $0x150] sm:$0xff]
        %v1841 = vld [vmem:[#allocation2 + $0x158] sm:$0xff]
        %v1842 = vld [vmem:[#allocation2 + $0x160] sm:$0xff]
        %v1843 = vld [vmem:[#allocation2 + $0x168] sm:$0xff]
        %v1844 = vld [vmem:[#allocation2 + $0x170] sm:$0xff]
        %v1845 = vld [vmem:[#allocation2 + $0x178] sm:$0xff]
        %v1846 = vld [vmem:[#allocation2 + $0x180] sm:$0xff]
        %v1847 = vld [vmem:[#allocation2 + $0x188] sm:$0xff]
        %v1848 = vld [vmem:[#allocation2 + $0x190] sm:$0xff]
        %v1849 = vld [vmem:[#allocation2 + $0x198] sm:$0xff]
        %v1850 = vld [vmem:[#allocation2 + $0x1a0] sm:$0xff]
        %v1851 = vld [vmem:[#allocation2 + $0x1a8] sm:$0xff]
        %v1852 = vld [vmem:[#allocation2 + $0x1b0] sm:$0xff]
        %v1853 = vld [vmem:[#allocation2 + $0x1b8] sm:$0xff]
        %v1854 = vld [vmem:[#allocation2 + $0x1c0] sm:$0xff]
        %v1855 = vld [vmem:[#allocation2 + $0x1c8] sm:$0xff]
        %v1856 = vld [vmem:[#allocation2 + $0x1d0] sm:$0xff]
        %v1857 = vld [vmem:[#allocation2 + $0x1d8] sm:$0xff]
        %v1858 = vld [vmem:[#allocation2 + $0x1e0] sm:$0xff]
        %v1859 = vld [vmem:[#allocation2 + $0x1e8] sm:$0xff]
        %v1860 = vld [vmem:[#allocation2 + $0x1f0] sm:$0xff]
        %v1861 = vld [vmem:[#allocation2 + $0x1f8] sm:$0xff]
        %v1862 = vld [vmem:[#allocation2 + $0x200] sm:$0xff]
        %v1863 = vld [vmem:[#allocation2 + $0x208] sm:$0xff]
        %v1864 = vld [vmem:[#allocation2 + $0x210] sm:$0xff]
        %v1865 = vld [vmem:[#allocation2 + $0x218] sm:$0xff]
        %v1866 = vld [vmem:[#allocation2 + $0x220] sm:$0xff]
        %v1867 = vld [vmem:[#allocation2 + $0x228] sm:$0xff]
        %v1868 = vld [vmem:[#allocation2 + $0x230] sm:$0xff]
        %v1869 = vld [vmem:[#allocation2 + $0x238] sm:$0xff]
        %v1870 = vld [vmem:[#allocation2 + $0x240] sm:$0xff]
        %v1871 = vld [vmem:[#allocation2 + $0x248] sm:$0xff]
        %v1872 = vld [vmem:[#allocation2 + $0x250] sm:$0xff]
        %v1873 = vld [vmem:[#allocation2 + $0x258] sm:$0xff]
        %v1874 = vld [vmem:[#allocation2 + $0x260] sm:$0xff]
        %v1875 = vld [vmem:[#allocation2 + $0x268] sm:$0xff]
        %v1876 = vld [vmem:[#allocation2 + $0x270] sm:$0xff]
        %v1877 = vld [vmem:[#allocation2 + $0x278] sm:$0xff]
        %v1878 = vld [vmem:[#allocation2 + $0x280] sm:$0xff]
        %v1879 = vld [vmem:[#allocation2 + $0x288] sm:$0xff]
        %v1880 = vld [vmem:[#allocation2 + $0x290] sm:$0xff]
        %v1881 = vld [vmem:[#allocation2 + $0x298] sm:$0xff]
        %v1882 = vld [vmem:[#allocation2 + $0x2a0] sm:$0xff]
        %v1883 = vld [vmem:[#allocation2 + $0x2a8] sm:$0xff]
        %v1884 = vld [vmem:[#allocation2 + $0x2b0] sm:$0xff]
        %v1885 = vld [vmem:[#allocation2 + $0x2b8] sm:$0xff]
        %v1886 = vld [vmem:[#allocation2 + $0x2c0] sm:$0xff]
        %v1887 = vld [vmem:[#allocation2 + $0x2c8] sm:$0xff]
        %v1888 = vld [vmem:[#allocation2 + $0x2d0] sm:$0xff]
        %v1889 = vld [vmem:[#allocation2 + $0x2d8] sm:$0xff]
        %v1890 = vld [vmem:[#allocation2 + $0x2e0] sm:$0xff]
        %v1891 = vld [vmem:[#allocation2 + $0x2e8] sm:$0xff]
        %v1892 = vld [vmem:[#allocation2 + $0x2f0] sm:$0xff]
        %v1893 = vld [vmem:[#allocation2 + $0x2f8] sm:$0xff]
        %v1894 = vld [vmem:[#allocation2 + $0x300] sm:$0xff]
        %v1895 = vld [vmem:[#allocation2 + $0x308] sm:$0xff]
        %v1896 = vld [vmem:[#allocation2 + $0x310] sm:$0xff]
        %v1897 = vld [vmem:[#allocation2 + $0x318] sm:$0xff]
        %v1898 = vld [vmem:[#allocation2 + $0x320] sm:$0xff]
        %v1899 = vld [vmem:[#allocation2 + $0x328] sm:$0xff]
        %v1900 = vld [vmem:[#allocation2 + $0x330] sm:$0xff]
        %v1901 = vld [vmem:[#allocation2 + $0x338] sm:$0xff]
        %v1902 = vld [vmem:[#allocation2 + $0x340] sm:$0xff]
        %v1903 = vld [vmem:[#allocation2 + $0x348] sm:$0xff]
        %v1904 = vld [vmem:[#allocation2 + $0x350] sm:$0xff]
        %v1905 = vld [vmem:[#allocation2 + $0x358] sm:$0xff]
        %v1906 = vld [vmem:[#allocation2 + $0x360] sm:$0xff]
        %v1907 = vld [vmem:[#allocation2 + $0x368] sm:$0xff]
        %v1908 = vld [vmem:[#allocation2 + $0x370] sm:$0xff]
        %v1909 = vld [vmem:[#allocation2 + $0x378] sm:$0xff]
        %v1910 = vld [vmem:[#allocation2 + $0x380] sm:$0xff]
        %v1911 = vld [vmem:[#allocation2 + $0x388] sm:$0xff]
        %v1912 = vld [vmem:[#allocation2 + $0x390] sm:$0xff]
        %v1913 = vld [vmem:[#allocation2 + $0x398] sm:$0xff]
        %v1914 = vld [vmem:[#allocation2 + $0x3a0] sm:$0xff]
        %v1915 = vld [vmem:[#allocation2 + $0x3a8] sm:$0xff]
        %v1916 = vld [vmem:[#allocation2 + $0x3b0] sm:$0xff]
        %v1917 = vld [vmem:[#allocation2 + $0x3b8] sm:$0xff]
        %v1918 = vld [vmem:[#allocation2 + $0x3c0] sm:$0xff]
        %v1919 = vld [vmem:[#allocation2 + $0x3c8] sm:$0xff]
        %v1920 = vld [vmem:[#allocation2 + $0x3d0] sm:$0xff]
        %v1921 = vld [vmem:[#allocation2 + $0x3d8] sm:$0xff]
        %v1922 = vld [vmem:[#allocation2 + $0x3e0] sm:$0xff]
        %v1923 = vld [vmem:[#allocation2 + $0x3e8] sm:$0xff]
        %v1924 = vld [vmem:[#allocation2 + $0x3f0] sm:$0xff]
        %v1925 = vld [vmem:[#allocation2 + $0x3f8] sm:$0xff]
        %v1926 = vld [vmem:[%s4] sm:$0x3]
        %v1928 = vlaneseq
        %v1929 = vshrl.u32 %v1928, 7
        %v1930 = vsub.s32 0, %v1929
        %v1931 = vrot.slane %v1926, %v1930
        %v1932 = vlaneseq
        %v1933 = vshrl.u32 %v1932, 7
        %v1934 = vsub.s32 1, %v1933
        %v1935 = vrot.slane %v1926, %v1934
        %v2066 = vunpack.c.l.b16 %v1798
        %v2067 = vunpack.c.h.b16 %v1798
        %v2068 = vunpack.c.l.b16 %v1799
        %v2069 = vunpack.c.h.b16 %v1799
        %v2070 = vunpack.c.l.b16 %v1800
        %v2071 = vunpack.c.h.b16 %v1800
        %v2072 = vunpack.c.l.b16 %v1801
        %v2073 = vunpack.c.h.b16 %v1801
        %v2074 = vunpack.c.l.b16 %v1802
        %v2075 = vunpack.c.h.b16 %v1802
        %v2076 = vunpack.c.l.b16 %v1803
        %v2077 = vunpack.c.h.b16 %v1803
        %v2078 = vunpack.c.l.b16 %v1804
        %v2079 = vunpack.c.h.b16 %v1804
        %v2080 = vunpack.c.l.b16 %v1805
        %v2081 = vunpack.c.h.b16 %v1805
        %v2082 = vunpack.c.l.b16 %v1806
        %v2083 = vunpack.c.h.b16 %v1806
        %v2084 = vunpack.c.l.b16 %v1807
        %v2085 = vunpack.c.h.b16 %v1807
        %v2086 = vunpack.c.l.b16 %v1808
        %v2087 = vunpack.c.h.b16 %v1808
        %v2088 = vunpack.c.l.b16 %v1809
        %v2089 = vunpack.c.h.b16 %v1809
        %v2090 = vunpack.c.l.b16 %v1810
        %v2091 = vunpack.c.h.b16 %v1810
        %v2092 = vunpack.c.l.b16 %v1811
        %v2093 = vunpack.c.h.b16 %v1811
        %v2094 = vunpack.c.l.b16 %v1812
        %v2095 = vunpack.c.h.b16 %v1812
        %v2096 = vunpack.c.l.b16 %v1813
        %v2097 = vunpack.c.h.b16 %v1813
        %v2098 = vunpack.c.l.b16 %v1814
        %v2099 = vunpack.c.h.b16 %v1814
        %v2100 = vunpack.c.l.b16 %v1815
        %v2101 = vunpack.c.h.b16 %v1815
        %v2102 = vunpack.c.l.b16 %v1816
        %v2103 = vunpack.c.h.b16 %v1816
        %v2104 = vunpack.c.l.b16 %v1817
        %v2105 = vunpack.c.h.b16 %v1817
        %v2106 = vunpack.c.l.b16 %v1818
        %v2107 = vunpack.c.h.b16 %v1818
        %v2108 = vunpack.c.l.b16 %v1819
        %v2109 = vunpack.c.h.b16 %v1819
        %v2110 = vunpack.c.l.b16 %v1820
        %v2111 = vunpack.c.h.b16 %v1820
        %v2112 = vunpack.c.l.b16 %v1821
        %v2113 = vunpack.c.h.b16 %v1821
        %v2114 = vunpack.c.l.b16 %v1822
        %v2115 = vunpack.c.h.b16 %v1822
        %v2116 = vunpack.c.l.b16 %v1823
        %v2117 = vunpack.c.h.b16 %v1823
        %v2118 = vunpack.c.l.b16 %v1824
        %v2119 = vunpack.c.h.b16 %v1824
        %v2120 = vunpack.c.l.b16 %v1825
        %v2121 = vunpack.c.h.b16 %v1825
        %v2122 = vunpack.c.l.b16 %v1826
        %v2123 = vunpack.c.h.b16 %v1826
        %v2124 = vunpack.c.l.b16 %v1827
        %v2125 = vunpack.c.h.b16 %v1827
        %v2126 = vunpack.c.l.b16 %v1828
        %v2127 = vunpack.c.h.b16 %v1828
        %v2128 = vunpack.c.l.b16 %v1829
        %v2129 = vunpack.c.h.b16 %v1829
        %v2130 = vunpack.c.l.b16 %v1830
        %v2131 = vunpack.c.h.b16 %v1830
        %v2132 = vunpack.c.l.b16 %v1831
        %v2133 = vunpack.c.h.b16 %v1831
        %v2134 = vunpack.c.l.b16 %v1832
        %v2135 = vunpack.c.h.b16 %v1832
        %v2136 = vunpack.c.l.b16 %v1833
        %v2137 = vunpack.c.h.b16 %v1833
        %v2138 = vunpack.c.l.b16 %v1834
        %v2139 = vunpack.c.h.b16 %v1834
        %v2140 = vunpack.c.l.b16 %v1835
        %v2141 = vunpack.c.h.b16 %v1835
        %v2142 = vunpack.c.l.b16 %v1836
        %v2143 = vunpack.c.h.b16 %v1836
        %v2144 = vunpack.c.l.b16 %v1837
        %v2145 = vunpack.c.h.b16 %v1837
        %v2146 = vunpack.c.l.b16 %v1838
        %v2147 = vunpack.c.h.b16 %v1838
        %v2148 = vunpack.c.l.b16 %v1839
        %v2149 = vunpack.c.h.b16 %v1839
        %v2150 = vunpack.c.l.b16 %v1840
        %v2151 = vunpack.c.h.b16 %v1840
        %v2152 = vunpack.c.l.b16 %v1841
        %v2153 = vunpack.c.h.b16 %v1841
        %v2154 = vunpack.c.l.b16 %v1842
        %v2155 = vunpack.c.h.b16 %v1842
        %v2156 = vunpack.c.l.b16 %v1843
        %v2157 = vunpack.c.h.b16 %v1843
        %v2158 = vunpack.c.l.b16 %v1844
        %v2159 = vunpack.c.h.b16 %v1844
        %v2160 = vunpack.c.l.b16 %v1845
        %v2161 = vunpack.c.h.b16 %v1845
        %v2162 = vunpack.c.l.b16 %v1846
        %v2163 = vunpack.c.h.b16 %v1846
        %v2164 = vunpack.c.l.b16 %v1847
        %v2165 = vunpack.c.h.b16 %v1847
        %v2166 = vunpack.c.l.b16 %v1848
        %v2167 = vunpack.c.h.b16 %v1848
        %v2168 = vunpack.c.l.b16 %v1849
        %v2169 = vunpack.c.h.b16 %v1849
        %v2170 = vunpack.c.l.b16 %v1850
        %v2171 = vunpack.c.h.b16 %v1850
        %v2172 = vunpack.c.l.b16 %v1851
        %v2173 = vunpack.c.h.b16 %v1851
        %v2174 = vunpack.c.l.b16 %v1852
        %v2175 = vunpack.c.h.b16 %v1852
        %v2176 = vunpack.c.l.b16 %v1853
        %v2177 = vunpack.c.h.b16 %v1853
        %v2178 = vunpack.c.l.b16 %v1854
        %v2179 = vunpack.c.h.b16 %v1854
        %v2180 = vunpack.c.l.b16 %v1855
        %v2181 = vunpack.c.h.b16 %v1855
        %v2182 = vunpack.c.l.b16 %v1856
        %v2183 = vunpack.c.h.b16 %v1856
        %v2184 = vunpack.c.l.b16 %v1857
        %v2185 = vunpack.c.h.b16 %v1857
        %v2186 = vunpack.c.l.b16 %v1858
        %v2187 = vunpack.c.h.b16 %v1858
        %v2188 = vunpack.c.l.b16 %v1859
        %v2189 = vunpack.c.h.b16 %v1859
        %v2190 = vunpack.c.l.b16 %v1860
        %v2191 = vunpack.c.h.b16 %v1860
        %v2192 = vunpack.c.l.b16 %v1861
        %v2193 = vunpack.c.h.b16 %v1861
        %v2194 = vunpack.c.l.b16 %v1862
        %v2195 = vunpack.c.h.b16 %v1862
        %v2196 = vunpack.c.l.b16 %v1863
        %v2197 = vunpack.c.h.b16 %v1863
        %v2198 = vunpack.c.l.b16 %v1864
        %v2199 = vunpack.c.h.b16 %v1864
        %v2200 = vunpack.c.l.b16 %v1865
        %v2201 = vunpack.c.h.b16 %v1865
        %v2202 = vunpack.c.l.b16 %v1866
        %v2203 = vunpack.c.h.b16 %v1866
        %v2204 = vunpack.c.l.b16 %v1867
        %v2205 = vunpack.c.h.b16 %v1867
        %v2206 = vunpack.c.l.b16 %v1868
        %v2207 = vunpack.c.h.b16 %v1868
        %v2208 = vunpack.c.l.b16 %v1869
        %v2209 = vunpack.c.h.b16 %v1869
        %v2210 = vunpack.c.l.b16 %v1870
        %v2211 = vunpack.c.h.b16 %v1870
        %v2212 = vunpack.c.l.b16 %v1871
        %v2213 = vunpack.c.h.b16 %v1871
        %v2214 = vunpack.c.l.b16 %v1872
        %v2215 = vunpack.c.h.b16 %v1872
        %v2216 = vunpack.c.l.b16 %v1873
        %v2217 = vunpack.c.h.b16 %v1873
        %v2218 = vunpack.c.l.b16 %v1874
        %v2219 = vunpack.c.h.b16 %v1874
        %v2220 = vunpack.c.l.b16 %v1875
        %v2221 = vunpack.c.h.b16 %v1875
        %v2222 = vunpack.c.l.b16 %v1876
        %v2223 = vunpack.c.h.b16 %v1876
        %v2224 = vunpack.c.l.b16 %v1877
        %v2225 = vunpack.c.h.b16 %v1877
        %v2226 = vunpack.c.l.b16 %v1878
        %v2227 = vunpack.c.h.b16 %v1878
        %v2228 = vunpack.c.l.b16 %v1879
        %v2229 = vunpack.c.h.b16 %v1879
        %v2230 = vunpack.c.l.b16 %v1880
        %v2231 = vunpack.c.h.b16 %v1880
        %v2232 = vunpack.c.l.b16 %v1881
        %v2233 = vunpack.c.h.b16 %v1881
        %v2234 = vunpack.c.l.b16 %v1882
        %v2235 = vunpack.c.h.b16 %v1882
        %v2236 = vunpack.c.l.b16 %v1883
        %v2237 = vunpack.c.h.b16 %v1883
        %v2238 = vunpack.c.l.b16 %v1884
        %v2239 = vunpack.c.h.b16 %v1884
        %v2240 = vunpack.c.l.b16 %v1885
        %v2241 = vunpack.c.h.b16 %v1885
        %v2242 = vunpack.c.l.b16 %v1886
        %v2243 = vunpack.c.h.b16 %v1886
        %v2244 = vunpack.c.l.b16 %v1887
        %v2245 = vunpack.c.h.b16 %v1887
        %v2246 = vunpack.c.l.b16 %v1888
        %v2247 = vunpack.c.h.b16 %v1888
        %v2248 = vunpack.c.l.b16 %v1889
        %v2249 = vunpack.c.h.b16 %v1889
        %v2250 = vunpack.c.l.b16 %v1890
        %v2251 = vunpack.c.h.b16 %v1890
        %v2252 = vunpack.c.l.b16 %v1891
        %v2253 = vunpack.c.h.b16 %v1891
        %v2254 = vunpack.c.l.b16 %v1892
        %v2255 = vunpack.c.h.b16 %v1892
        %v2256 = vunpack.c.l.b16 %v1893
        %v2257 = vunpack.c.h.b16 %v1893
        %v2258 = vunpack.c.l.b16 %v1894
        %v2259 = vunpack.c.h.b16 %v1894
        %v2260 = vunpack.c.l.b16 %v1895
        %v2261 = vunpack.c.h.b16 %v1895
        %v2262 = vunpack.c.l.b16 %v1896
        %v2263 = vunpack.c.h.b16 %v1896
        %v2264 = vunpack.c.l.b16 %v1897
        %v2265 = vunpack.c.h.b16 %v1897
        %v2266 = vunpack.c.l.b16 %v1898
        %v2267 = vunpack.c.h.b16 %v1898
        %v2268 = vunpack.c.l.b16 %v1899
        %v2269 = vunpack.c.h.b16 %v1899
        %v2270 = vunpack.c.l.b16 %v1900
        %v2271 = vunpack.c.h.b16 %v1900
        %v2272 = vunpack.c.l.b16 %v1901
        %v2273 = vunpack.c.h.b16 %v1901
        %v2274 = vunpack.c.l.b16 %v1902
        %v2275 = vunpack.c.h.b16 %v1902
        %v2276 = vunpack.c.l.b16 %v1903
        %v2277 = vunpack.c.h.b16 %v1903
        %v2278 = vunpack.c.l.b16 %v1904
        %v2279 = vunpack.c.h.b16 %v1904
        %v2280 = vunpack.c.l.b16 %v1905
        %v2281 = vunpack.c.h.b16 %v1905
        %v2282 = vunpack.c.l.b16 %v1906
        %v2283 = vunpack.c.h.b16 %v1906
        %v2284 = vunpack.c.l.b16 %v1907
        %v2285 = vunpack.c.h.b16 %v1907
        %v2286 = vunpack.c.l.b16 %v1908
        %v2287 = vunpack.c.h.b16 %v1908
        %v2288 = vunpack.c.l.b16 %v1909
        %v2289 = vunpack.c.h.b16 %v1909
        %v2290 = vunpack.c.l.b16 %v1910
        %v2291 = vunpack.c.h.b16 %v1910
        %v2292 = vunpack.c.l.b16 %v1911
        %v2293 = vunpack.c.h.b16 %v1911
        %v2294 = vunpack.c.l.b16 %v1912
        %v2295 = vunpack.c.h.b16 %v1912
        %v2296 = vunpack.c.l.b16 %v1913
        %v2297 = vunpack.c.h.b16 %v1913
        %v2298 = vunpack.c.l.b16 %v1914
        %v2299 = vunpack.c.h.b16 %v1914
        %v2300 = vunpack.c.l.b16 %v1915
        %v2301 = vunpack.c.h.b16 %v1915
        %v2302 = vunpack.c.l.b16 %v1916
        %v2303 = vunpack.c.h.b16 %v1916
        %v2304 = vunpack.c.l.b16 %v1917
        %v2305 = vunpack.c.h.b16 %v1917
        %v2306 = vunpack.c.l.b16 %v1918
        %v2307 = vunpack.c.h.b16 %v1918
        %v2308 = vunpack.c.l.b16 %v1919
        %v2309 = vunpack.c.h.b16 %v1919
        %v2310 = vunpack.c.l.b16 %v1920
        %v2311 = vunpack.c.h.b16 %v1920
        %v2312 = vunpack.c.l.b16 %v1921
        %v2313 = vunpack.c.h.b16 %v1921
        %v2314 = vunpack.c.l.b16 %v1922
        %v2315 = vunpack.c.h.b16 %v1922
        %v2316 = vunpack.c.l.b16 %v1923
        %v2317 = vunpack.c.h.b16 %v1923
        %v2318 = vunpack.c.l.b16 %v1924
        %v2319 = vunpack.c.h.b16 %v1924
        %v2320 = vunpack.c.l.b16 %v1925
        %v2321 = vunpack.c.h.b16 %v1925
        %v2322 = vpack.c.b16 %v2068, %v2066
        %v2323 = vpack.c.b16 %v2069, %v2067
        %v2324 = vpack.c.b16 %v2072, %v2070
        %v2325 = vpack.c.b16 %v2073, %v2071
        %v2326 = vpack.c.b16 %v2076, %v2074
        %v2327 = vpack.c.b16 %v2077, %v2075
        %v2328 = vpack.c.b16 %v2080, %v2078
        %v2329 = vpack.c.b16 %v2081, %v2079
        %v2330 = vpack.c.b16 %v2084, %v2082
        %v2331 = vpack.c.b16 %v2085, %v2083
        %v2332 = vpack.c.b16 %v2088, %v2086
        %v2333 = vpack.c.b16 %v2089, %v2087
        %v2334 = vpack.c.b16 %v2092, %v2090
        %v2335 = vpack.c.b16 %v2093, %v2091
        %v2336 = vpack.c.b16 %v2096, %v2094
        %v2337 = vpack.c.b16 %v2097, %v2095
        %v2338 = vpack.c.b16 %v2100, %v2098
        %v2339 = vpack.c.b16 %v2101, %v2099
        %v2340 = vpack.c.b16 %v2104, %v2102
        %v2341 = vpack.c.b16 %v2105, %v2103
        %v2342 = vpack.c.b16 %v2108, %v2106
        %v2343 = vpack.c.b16 %v2109, %v2107
        %v2344 = vpack.c.b16 %v2112, %v2110
        %v2345 = vpack.c.b16 %v2113, %v2111
        %v2346 = vpack.c.b16 %v2116, %v2114
        %v2347 = vpack.c.b16 %v2117, %v2115
        %v2348 = vpack.c.b16 %v2120, %v2118
        %v2349 = vpack.c.b16 %v2121, %v2119
        %v2350 = vpack.c.b16 %v2124, %v2122
        %v2351 = vpack.c.b16 %v2125, %v2123
        %v2352 = vpack.c.b16 %v2128, %v2126
        %v2353 = vpack.c.b16 %v2129, %v2127
        %v2354 = vpack.c.b16 %v2132, %v2130
        %v2355 = vpack.c.b16 %v2133, %v2131
        %v2356 = vpack.c.b16 %v2136, %v2134
        %v2357 = vpack.c.b16 %v2137, %v2135
        %v2358 = vpack.c.b16 %v2140, %v2138
        %v2359 = vpack.c.b16 %v2141, %v2139
        %v2360 = vpack.c.b16 %v2144, %v2142
        %v2361 = vpack.c.b16 %v2145, %v2143
        %v2362 = vpack.c.b16 %v2148, %v2146
        %v2363 = vpack.c.b16 %v2149, %v2147
        %v2364 = vpack.c.b16 %v2152, %v2150
        %v2365 = vpack.c.b16 %v2153, %v2151
        %v2366 = vpack.c.b16 %v2156, %v2154
        %v2367 = vpack.c.b16 %v2157, %v2155
        %v2368 = vpack.c.b16 %v2160, %v2158
        %v2369 = vpack.c.b16 %v2161, %v2159
        %v2370 = vpack.c.b16 %v2164, %v2162
        %v2371 = vpack.c.b16 %v2165, %v2163
        %v2372 = vpack.c.b16 %v2168, %v2166
        %v2373 = vpack.c.b16 %v2169, %v2167
        %v2374 = vpack.c.b16 %v2172, %v2170
        %v2375 = vpack.c.b16 %v2173, %v2171
        %v2376 = vpack.c.b16 %v2176, %v2174
        %v2377 = vpack.c.b16 %v2177, %v2175
        %v2378 = vpack.c.b16 %v2180, %v2178
        %v2379 = vpack.c.b16 %v2181, %v2179
        %v2380 = vpack.c.b16 %v2184, %v2182
        %v2381 = vpack.c.b16 %v2185, %v2183
        %v2382 = vpack.c.b16 %v2188, %v2186
        %v2383 = vpack.c.b16 %v2189, %v2187
        %v2384 = vpack.c.b16 %v2192, %v2190
        %v2385 = vpack.c.b16 %v2193, %v2191
        %v2386 = vpack.c.b16 %v2196, %v2194
        %v2387 = vpack.c.b16 %v2197, %v2195
        %v2388 = vpack.c.b16 %v2200, %v2198
        %v2389 = vpack.c.b16 %v2201, %v2199
        %v2390 = vpack.c.b16 %v2204, %v2202
        %v2391 = vpack.c.b16 %v2205, %v2203
        %v2392 = vpack.c.b16 %v2208, %v2206
        %v2393 = vpack.c.b16 %v2209, %v2207
        %v2394 = vpack.c.b16 %v2212, %v2210
        %v2395 = vpack.c.b16 %v2213, %v2211
        %v2396 = vpack.c.b16 %v2216, %v2214
        %v2397 = vpack.c.b16 %v2217, %v2215
        %v2398 = vpack.c.b16 %v2220, %v2218
        %v2399 = vpack.c.b16 %v2221, %v2219
        %v2400 = vpack.c.b16 %v2224, %v2222
        %v2401 = vpack.c.b16 %v2225, %v2223
        %v2402 = vpack.c.b16 %v2228, %v2226
        %v2403 = vpack.c.b16 %v2229, %v2227
        %v2404 = vpack.c.b16 %v2232, %v2230
        %v2405 = vpack.c.b16 %v2233, %v2231
        %v2406 = vpack.c.b16 %v2236, %v2234
        %v2407 = vpack.c.b16 %v2237, %v2235
        %v2408 = vpack.c.b16 %v2240, %v2238
        %v2409 = vpack.c.b16 %v2241, %v2239
        %v2410 = vpack.c.b16 %v2244, %v2242
        %v2411 = vpack.c.b16 %v2245, %v2243
        %v2412 = vpack.c.b16 %v2248, %v2246
        %v2413 = vpack.c.b16 %v2249, %v2247
        %v2414 = vpack.c.b16 %v2252, %v2250
        %v2415 = vpack.c.b16 %v2253, %v2251
        %v2416 = vpack.c.b16 %v2256, %v2254
        %v2417 = vpack.c.b16 %v2257, %v2255
        %v2418 = vpack.c.b16 %v2260, %v2258
        %v2419 = vpack.c.b16 %v2261, %v2259
        %v2420 = vpack.c.b16 %v2264, %v2262
        %v2421 = vpack.c.b16 %v2265, %v2263
        %v2422 = vpack.c.b16 %v2268, %v2266
        %v2423 = vpack.c.b16 %v2269, %v2267
        %v2424 = vpack.c.b16 %v2272, %v2270
        %v2425 = vpack.c.b16 %v2273, %v2271
        %v2426 = vpack.c.b16 %v2276, %v2274
        %v2427 = vpack.c.b16 %v2277, %v2275
        %v2428 = vpack.c.b16 %v2280, %v2278
        %v2429 = vpack.c.b16 %v2281, %v2279
        %v2430 = vpack.c.b16 %v2284, %v2282
        %v2431 = vpack.c.b16 %v2285, %v2283
        %v2432 = vpack.c.b16 %v2288, %v2286
        %v2433 = vpack.c.b16 %v2289, %v2287
        %v2434 = vpack.c.b16 %v2292, %v2290
        %v2435 = vpack.c.b16 %v2293, %v2291
        %v2436 = vpack.c.b16 %v2296, %v2294
        %v2437 = vpack.c.b16 %v2297, %v2295
        %v2438 = vpack.c.b16 %v2300, %v2298
        %v2439 = vpack.c.b16 %v2301, %v2299
        %v2440 = vpack.c.b16 %v2304, %v2302
        %v2441 = vpack.c.b16 %v2305, %v2303
        %v2442 = vpack.c.b16 %v2308, %v2306
        %v2443 = vpack.c.b16 %v2309, %v2307
        %v2444 = vpack.c.b16 %v2312, %v2310
        %v2445 = vpack.c.b16 %v2313, %v2311
        %v2446 = vpack.c.b16 %v2316, %v2314
        %v2447 = vpack.c.b16 %v2317, %v2315
        %v2448 = vpack.c.b16 %v2320, %v2318
        %v2449 = vpack.c.b16 %v2321, %v2319
        %2578 = vmatprep.subr.bf16.mxu0 %v2323
        %2579 = vmatpush1.bf16.msra.mxu0 %v2322
        %2580 = vmatprep.subr.bf16.mxu0 %v2325
        %2581 = vmatpush1.bf16.msra.mxu0 %v2324
        %2582 = vmatprep.subr.bf16.mxu0 %v2327
        %2583 = vmatpush1.bf16.msra.mxu0 %v2326
        %2584 = vmatprep.subr.bf16.mxu0 %v2329
        %2585 = vmatpush1.bf16.msra.mxu0 %v2328
        %2586 = vmatprep.subr.bf16.mxu0 %v2331
        %2587 = vmatpush1.bf16.msra.mxu0 %v2330
        %2588 = vmatprep.subr.bf16.mxu0 %v2333
        %2589 = vmatpush1.bf16.msra.mxu0 %v2332
        %2590 = vmatprep.subr.bf16.mxu0 %v2335
        %2591 = vmatpush1.bf16.msra.mxu0 %v2334
        %2592 = vmatprep.subr.bf16.mxu0 %v2337
        %2593 = vmatpush1.bf16.msra.mxu0 %v2336
        %2594 = vmatprep.subr.bf16.mxu0 %v2339
        %2595 = vmatpush1.bf16.msra.mxu0 %v2338
        %2596 = vmatprep.subr.bf16.mxu0 %v2341
        %2597 = vmatpush1.bf16.msra.mxu0 %v2340
        %2598 = vmatprep.subr.bf16.mxu0 %v2343
        %2599 = vmatpush1.bf16.msra.mxu0 %v2342
        %2600 = vmatprep.subr.bf16.mxu0 %v2345
        %2601 = vmatpush1.bf16.msra.mxu0 %v2344
        %2602 = vmatprep.subr.bf16.mxu0 %v2347
        %2603 = vmatpush1.bf16.msra.mxu0 %v2346
        %2604 = vmatprep.subr.bf16.mxu0 %v2349
        %2605 = vmatpush1.bf16.msra.mxu0 %v2348
        %2606 = vmatprep.subr.bf16.mxu0 %v2351
        %2607 = vmatpush1.bf16.msra.mxu0 %v2350
        %2608 = vmatprep.subr.bf16.mxu0 %v2353
        %2609 = vmatpush1.bf16.msra.mxu0 %v2352
        %2610 = vmatprep.mubr.bf16.mxu0 %v1735
        %2611 = vmatmul.mubr.bf16.gmra.mrb[0].mxu0 %v1734
        %v2612 = vpop.f32.mrb[0].mxu0
        %v2613 = vadd.f32 %v1931, %v2612
        %v2614 = vpop.f32.mrb[0].mxu0
        %v2615 = vadd.f32 %v1935, %v2614
        %v2616 = vpop.f32.mrb[0].mxu0
        %v2617 = vadd.f32 %v1931, %v2616
        %v2618 = vpop.f32.mrb[0].mxu0
        %v2619 = vadd.f32 %v1935, %v2618
        %2620 = vmatprep.mubr.bf16.mxu0 %v1743
        %2621 = vmatmul.mubr.bf16.gmra.mrb[0].mxu0 %v1742
        %v2622 = vpop.f32.mrb[0].mxu0
        %v2623 = vadd.f32 %v1931, %v2622
        %v2624 = vpop.f32.mrb[0].mxu0
        %v2625 = vadd.f32 %v1935, %v2624
        %v2626 = vpop.f32.mrb[0].mxu0
        %v2627 = vadd.f32 %v1931, %v2626
        %v2628 = vpop.f32.mrb[0].mxu0
        %v2629 = vadd.f32 %v1935, %v2628
        %2630 = vmatprep.mubr.bf16.mxu0 %v1751
        %2631 = vmatmul.mubr.bf16.gmra.mrb[0].mxu0 %v1750
        %v2632 = vpop.f32.mrb[0].mxu0
        %v2633 = vadd.f32 %v1931, %v2632
        %v2634 = vpop.f32.mrb[0].mxu0
        %v2635 = vadd.f32 %v1935, %v2634
        %v2636 = vpop.f32.mrb[0].mxu0
        %v2637 = vadd.f32 %v1931, %v2636
        %v2638 = vpop.f32.mrb[0].mxu0
        %v2639 = vadd.f32 %v1935, %v2638
        %2640 = vmatprep.mubr.bf16.mxu0 %v1759
        %2641 = vmatmul.mubr.bf16.gmra.mrb[0].mxu0 %v1758
        %v2642 = vpop.f32.mrb[0].mxu0
        %v2643 = vadd.f32 %v1931, %v2642
        %v2644 = vpop.f32.mrb[0].mxu0
        %v2645 = vadd.f32 %v1935, %v2644
        %v2646 = vpop.f32.mrb[0].mxu0
        %v2647 = vadd.f32 %v1931, %v2646
        %v2648 = vpop.f32.mrb[0].mxu0
        %v2649 = vadd.f32 %v1935, %v2648
        %2650 = vmatprep.mubr.bf16.mxu0 %v1767
        %2651 = vmatmul.mubr.bf16.gmra.mrb[0].mxu0 %v1766
        %v2652 = vpop.f32.mrb[0].mxu0
        %v2653 = vadd.f32 %v1931, %v2652
        %v2654 = vpop.f32.mrb[0].mxu0
        %v2655 = vadd.f32 %v1935, %v2654
        %v2656 = vpop.f32.mrb[0].mxu0
        %v2657 = vadd.f32 %v1931, %v2656
        %v2658 = vpop.f32.mrb[0].mxu0
        %v2659 = vadd.f32 %v1935, %v2658
        %2660 = vmatprep.mubr.bf16.mxu0 %v1775
        %2661 = vmatmul.mubr.bf16.gmra.mrb[0].mxu0 %v1774
        %v2662 = vpop.f32.mrb[0].mxu0
        %v2663 = vadd.f32 %v1931, %v2662
        %v2664 = vpop.f32.mrb[0].mxu0
        %v2665 = vadd.f32 %v1935, %v2664
        %v2666 = vpop.f32.mrb[0].mxu0
        %v2667 = vadd.f32 %v1931, %v2666
        %v2668 = vpop.f32.mrb[0].mxu0
        %v2669 = vadd.f32 %v1935, %v2668
        %2670 = vmatprep.mubr.bf16.mxu0 %v1783
        %2671 = vmatmul.mubr.bf16.gmra.mrb[0].mxu0 %v1782
        %v2672 = vpop.f32.mrb[0].mxu0
        %v2673 = vadd.f32 %v1931, %v2672
        %v2674 = vpop.f32.mrb[0].mxu0
        %v2675 = vadd.f32 %v1935, %v2674
        %v2676 = vpop.f32.mrb[0].mxu0
        %v2677 = vadd.f32 %v1931, %v2676
        %v2678 = vpop.f32.mrb[0].mxu0
        %v2679 = vadd.f32 %v1935, %v2678
        %2680 = vmatprep.mubr.bf16.mxu0 %v1791
        %2681 = vmatmul.mubr.bf16.gmra.mrb[0].mxu0 %v1790
        %v2682 = vpop.f32.mrb[0].mxu0
        %v2683 = vadd.f32 %v1931, %v2682
        %v2684 = vpop.f32.mrb[0].mxu0
        %v2685 = vadd.f32 %v1935, %v2684
        %v2686 = vpop.f32.mrb[0].mxu0
        %v2687 = vadd.f32 %v1931, %v2686
        %v2688 = vpop.f32.mrb[0].mxu0
        %v2689 = vadd.f32 %v1935, %v2688
        %2690 = vdwg.mxu0
        %2691 = vmatprep.subr.bf16.mxu0 %v2355
        %2692 = vmatpush1.bf16.msra.mxu0 %v2354
        %2693 = vmatprep.subr.bf16.mxu0 %v2357
        %2694 = vmatpush1.bf16.msra.mxu0 %v2356
        %2695 = vmatprep.subr.bf16.mxu0 %v2359
        %2696 = vmatpush1.bf16.msra.mxu0 %v2358
        %2697 = vmatprep.subr.bf16.mxu0 %v2361
        %2698 = vmatpush1.bf16.msra.mxu0 %v2360
        %2699 = vmatprep.subr.bf16.mxu0 %v2363
        %2700 = vmatpush1.bf16.msra.mxu0 %v2362
        %2701 = vmatprep.subr.bf16.mxu0 %v2365
        %2702 = vmatpush1.bf16.msra.mxu0 %v2364
        %2703 = vmatprep.subr.bf16.mxu0 %v2367
        %2704 = vmatpush1.bf16.msra.mxu0 %v2366
        %2705 = vmatprep.subr.bf16.mxu0 %v2369
        %2706 = vmatpush1.bf16.msra.mxu0 %v2368
        %2707 = vmatprep.subr.bf16.mxu0 %v2371
        %2708 = vmatpush1.bf16.msra.mxu0 %v2370
        %2709 = vmatprep.subr.bf16.mxu0 %v2373
        %2710 = vmatpush1.bf16.msra.mxu0 %v2372
        %2711 = vmatprep.subr.bf16.mxu0 %v2375
        %2712 = vmatpush1.bf16.msra.mxu0 %v2374
        %2713 = vmatprep.subr.bf16.mxu0 %v2377
        %2714 = vmatpush1.bf16.msra.mxu0 %v2376
        %2715 = vmatprep.subr.bf16.mxu0 %v2379
        %2716 = vmatpush1.bf16.msra.mxu0 %v2378
        %2717 = vmatprep.subr.bf16.mxu0 %v2381
        %2718 = vmatpush1.bf16.msra.mxu0 %v2380
        %2719 = vmatprep.subr.bf16.mxu0 %v2383
        %2720 = vmatpush1.bf16.msra.mxu0 %v2382
        %2721 = vmatprep.subr.bf16.mxu0 %v2385
        %2722 = vmatpush1.bf16.msra.mxu0 %v2384
        %2723 = vmatprep.mubr.bf16.mxu0 %v1737
        %2724 = vmatmul.mubr.bf16.gmra.mrb[0].mxu0 %v1736
        %v2725 = vpop.f32.mrb[0].mxu0
        %v2726 = vadd.f32 %v2613, %v2725
        %v2727 = vpop.f32.mrb[0].mxu0
        %v2728 = vadd.f32 %v2615, %v2727
        %v2729 = vpop.f32.mrb[0].mxu0
        %v2730 = vadd.f32 %v2617, %v2729
        %v2731 = vpop.f32.mrb[0].mxu0
        %v2732 = vadd.f32 %v2619, %v2731
        %2733 = vmatprep.mubr.bf16.mxu0 %v1745
        %2734 = vmatmul.mubr.bf16.gmra.mrb[0].mxu0 %v1744
        %v2735 = vpop.f32.mrb[0].mxu0
        %v2736 = vadd.f32 %v2623, %v2735
        %v2737 = vpop.f32.mrb[0].mxu0
        %v2738 = vadd.f32 %v2625, %v2737
        %v2739 = vpop.f32.mrb[0].mxu0
        %v2740 = vadd.f32 %v2627, %v2739
        %v2741 = vpop.f32.mrb[0].mxu0
        %v2742 = vadd.f32 %v2629, %v2741
        %2743 = vmatprep.mubr.bf16.mxu0 %v1753
        %2744 = vmatmul.mubr.bf16.gmra.mrb[0].mxu0 %v1752
        %v2745 = vpop.f32.mrb[0].mxu0
        %v2746 = vadd.f32 %v2633, %v2745
        %v2747 = vpop.f32.mrb[0].mxu0
        %v2748 = vadd.f32 %v2635, %v2747
        %v2749 = vpop.f32.mrb[0].mxu0
        %v2750 = vadd.f32 %v2637, %v2749
        %v2751 = vpop.f32.mrb[0].mxu0
        %v2752 = vadd.f32 %v2639, %v2751
        %2753 = vmatprep.mubr.bf16.mxu0 %v1761
        %2754 = vmatmul.mubr.bf16.gmra.mrb[0].mxu0 %v1760
        %v2755 = vpop.f32.mrb[0].mxu0
        %v2756 = vadd.f32 %v2643, %v2755
        %v2757 = vpop.f32.mrb[0].mxu0
        %v2758 = vadd.f32 %v2645, %v2757
        %v2759 = vpop.f32.mrb[0].mxu0
        %v2760 = vadd.f32 %v2647, %v2759
        %v2761 = vpop.f32.mrb[0].mxu0
        %v2762 = vadd.f32 %v2649, %v2761
        %2763 = vmatprep.mubr.bf16.mxu0 %v1769
        %2764 = vmatmul.mubr.bf16.gmra.mrb[0].mxu0 %v1768
        %v2765 = vpop.f32.mrb[0].mxu0
        %v2766 = vadd.f32 %v2653, %v2765
        %v2767 = vpop.f32.mrb[0].mxu0
        %v2768 = vadd.f32 %v2655, %v2767
        %v2769 = vpop.f32.mrb[0].mxu0
        %v2770 = vadd.f32 %v2657, %v2769
        %v2771 = vpop.f32.mrb[0].mxu0
        %v2772 = vadd.f32 %v2659, %v2771
        %2773 = vmatprep.mubr.bf16.mxu0 %v1777
        %2774 = vmatmul.mubr.bf16.gmra.mrb[0].mxu0 %v1776
        %v2775 = vpop.f32.mrb[0].mxu0
        %v2776 = vadd.f32 %v2663, %v2775
        %v2777 = vpop.f32.mrb[0].mxu0
        %v2778 = vadd.f32 %v2665, %v2777
        %v2779 = vpop.f32.mrb[0].mxu0
        %v2780 = vadd.f32 %v2667, %v2779
        %v2781 = vpop.f32.mrb[0].mxu0
        %v2782 = vadd.f32 %v2669, %v2781
        %2783 = vmatprep.mubr.bf16.mxu0 %v1785
        %2784 = vmatmul.mubr.bf16.gmra.mrb[0].mxu0 %v1784
        %v2785 = vpop.f32.mrb[0].mxu0
        %v2786 = vadd.f32 %v2673, %v2785
        %v2787 = vpop.f32.mrb[0].mxu0
        %v2788 = vadd.f32 %v2675, %v2787
        %v2789 = vpop.f32.mrb[0].mxu0
        %v2790 = vadd.f32 %v2677, %v2789
        %v2791 = vpop.f32.mrb[0].mxu0
        %v2792 = vadd.f32 %v2679, %v2791
        %2793 = vmatprep.mubr.bf16.mxu0 %v1793
        %2794 = vmatmul.mubr.bf16.gmra.mrb[0].mxu0 %v1792
        %v2795 = vpop.f32.mrb[0].mxu0
        %v2796 = vadd.f32 %v2683, %v2795
        %v2797 = vpop.f32.mrb[0].mxu0
        %v2798 = vadd.f32 %v2685, %v2797
        %v2799 = vpop.f32.mrb[0].mxu0
        %v2800 = vadd.f32 %v2687, %v2799
        %v2801 = vpop.f32.mrb[0].mxu0
        %v2802 = vadd.f32 %v2689, %v2801
        %2803 = vdwg.mxu0
        %2804 = vmatprep.subr.bf16.mxu0 %v2387
        %2805 = vmatpush1.bf16.msra.mxu0 %v2386
        %2806 = vmatprep.subr.bf16.mxu0 %v2389
        %2807 = vmatpush1.bf16.msra.mxu0 %v2388
        %2808 = vmatprep.subr.bf16.mxu0 %v2391
        %2809 = vmatpush1.bf16.msra.mxu0 %v2390
        %2810 = vmatprep.subr.bf16.mxu0 %v2393
        %2811 = vmatpush1.bf16.msra.mxu0 %v2392
        %2812 = vmatprep.subr.bf16.mxu0 %v2395
        %2813 = vmatpush1.bf16.msra.mxu0 %v2394
        %2814 = vmatprep.subr.bf16.mxu0 %v2397
        %2815 = vmatpush1.bf16.msra.mxu0 %v2396
        %2816 = vmatprep.subr.bf16.mxu0 %v2399
        %2817 = vmatpush1.bf16.msra.mxu0 %v2398
        %2818 = vmatprep.subr.bf16.mxu0 %v2401
        %2819 = vmatpush1.bf16.msra.mxu0 %v2400
        %2820 = vmatprep.subr.bf16.mxu0 %v2403
        %2821 = vmatpush1.bf16.msra.mxu0 %v2402
        %2822 = vmatprep.subr.bf16.mxu0 %v2405
        %2823 = vmatpush1.bf16.msra.mxu0 %v2404
        %2824 = vmatprep.subr.bf16.mxu0 %v2407
        %2825 = vmatpush1.bf16.msra.mxu0 %v2406
        %2826 = vmatprep.subr.bf16.mxu0 %v2409
        %2827 = vmatpush1.bf16.msra.mxu0 %v2408
        %2828 = vmatprep.subr.bf16.mxu0 %v2411
        %2829 = vmatpush1.bf16.msra.mxu0 %v2410
        %2830 = vmatprep.subr.bf16.mxu0 %v2413
        %2831 = vmatpush1.bf16.msra.mxu0 %v2412
        %2832 = vmatprep.subr.bf16.mxu0 %v2415
        %2833 = vmatpush1.bf16.msra.mxu0 %v2414
        %2834 = vmatprep.subr.bf16.mxu0 %v2417
        %2835 = vmatpush1.bf16.msra.mxu0 %v2416
        %2836 = vmatprep.mubr.bf16.mxu0 %v1739
        %2837 = vmatmul.mubr.bf16.gmra.mrb[0].mxu0 %v1738
        %v2838 = vpop.f32.mrb[0].mxu0
        %v2839 = vadd.f32 %v2726, %v2838
        %v2840 = vpop.f32.mrb[0].mxu0
        %v2841 = vadd.f32 %v2728, %v2840
        %v2842 = vpop.f32.mrb[0].mxu0
        %v2843 = vadd.f32 %v2730, %v2842
        %v2844 = vpop.f32.mrb[0].mxu0
        %v2845 = vadd.f32 %v2732, %v2844
        %2846 = vmatprep.mubr.bf16.mxu0 %v1747
        %2847 = vmatmul.mubr.bf16.gmra.mrb[0].mxu0 %v1746
        %v2848 = vpop.f32.mrb[0].mxu0
        %v2849 = vadd.f32 %v2736, %v2848
        %v2850 = vpop.f32.mrb[0].mxu0
        %v2851 = vadd.f32 %v2738, %v2850
        %v2852 = vpop.f32.mrb[0].mxu0
        %v2853 = vadd.f32 %v2740, %v2852
        %v2854 = vpop.f32.mrb[0].mxu0
        %v2855 = vadd.f32 %v2742, %v2854
        %2856 = vmatprep.mubr.bf16.mxu0 %v1755
        %2857 = vmatmul.mubr.bf16.gmra.mrb[0].mxu0 %v1754
        %v2858 = vpop.f32.mrb[0].mxu0
        %v2859 = vadd.f32 %v2746, %v2858
        %v2860 = vpop.f32.mrb[0].mxu0
        %v2861 = vadd.f32 %v2748, %v2860
        %v2862 = vpop.f32.mrb[0].mxu0
        %v2863 = vadd.f32 %v2750, %v2862
        %v2864 = vpop.f32.mrb[0].mxu0
        %v2865 = vadd.f32 %v2752, %v2864
        %2866 = vmatprep.mubr.bf16.mxu0 %v1763
        %2867 = vmatmul.mubr.bf16.gmra.mrb[0].mxu0 %v1762
        %v2868 = vpop.f32.mrb[0].mxu0
        %v2869 = vadd.f32 %v2756, %v2868
        %v2870 = vpop.f32.mrb[0].mxu0
        %v2871 = vadd.f32 %v2758, %v2870
        %v2872 = vpop.f32.mrb[0].mxu0
        %v2873 = vadd.f32 %v2760, %v2872
        %v2874 = vpop.f32.mrb[0].mxu0
        %v2875 = vadd.f32 %v2762, %v2874
        %2876 = vmatprep.mubr.bf16.mxu0 %v1771
        %2877 = vmatmul.mubr.bf16.gmra.mrb[0].mxu0 %v1770
        %v2878 = vpop.f32.mrb[0].mxu0
        %v2879 = vadd.f32 %v2766, %v2878
        %v2880 = vpop.f32.mrb[0].mxu0
        %v2881 = vadd.f32 %v2768, %v2880
        %v2882 = vpop.f32.mrb[0].mxu0
        %v2883 = vadd.f32 %v2770, %v2882
        %v2884 = vpop.f32.mrb[0].mxu0
        %v2885 = vadd.f32 %v2772, %v2884
        %2886 = vmatprep.mubr.bf16.mxu0 %v1779
        %2887 = vmatmul.mubr.bf16.gmra.mrb[0].mxu0 %v1778
        %v2888 = vpop.f32.mrb[0].mxu0
        %v2889 = vadd.f32 %v2776, %v2888
        %v2890 = vpop.f32.mrb[0].mxu0
        %v2891 = vadd.f32 %v2778, %v2890
        %v2892 = vpop.f32.mrb[0].mxu0
        %v2893 = vadd.f32 %v2780, %v2892
        %v2894 = vpop.f32.mrb[0].mxu0
        %v2895 = vadd.f32 %v2782, %v2894
        %2896 = vmatprep.mubr.bf16.mxu0 %v1787
        %2897 = vmatmul.mubr.bf16.gmra.mrb[0].mxu0 %v1786
        %v2898 = vpop.f32.mrb[0].mxu0
        %v2899 = vadd.f32 %v2786, %v2898
        %v2900 = vpop.f32.mrb[0].mxu0
        %v2901 = vadd.f32 %v2788, %v2900
        %v2902 = vpop.f32.mrb[0].mxu0
        %v2903 = vadd.f32 %v2790, %v2902
        %v2904 = vpop.f32.mrb[0].mxu0
        %v2905 = vadd.f32 %v2792, %v2904
        %2906 = vmatprep.mubr.bf16.mxu0 %v1795
        %2907 = vmatmul.mubr.bf16.gmra.mrb[0].mxu0 %v1794
        %v2908 = vpop.f32.mrb[0].mxu0
        %v2909 = vadd.f32 %v2796, %v2908
        %v2910 = vpop.f32.mrb[0].mxu0
        %v2911 = vadd.f32 %v2798, %v2910
        %v2912 = vpop.f32.mrb[0].mxu0
        %v2913 = vadd.f32 %v2800, %v2912
        %v2914 = vpop.f32.mrb[0].mxu0
        %v2915 = vadd.f32 %v2802, %v2914
        %2916 = vdwg.mxu0
        %2917 = vmatprep.subr.bf16.mxu0 %v2419
        %2918 = vmatpush1.bf16.msra.mxu0 %v2418
        %2919 = vmatprep.subr.bf16.mxu0 %v2421
        %2920 = vmatpush1.bf16.msra.mxu0 %v2420
        %2921 = vmatprep.subr.bf16.mxu0 %v2423
        %2922 = vmatpush1.bf16.msra.mxu0 %v2422
        %2923 = vmatprep.subr.bf16.mxu0 %v2425
        %2924 = vmatpush1.bf16.msra.mxu0 %v2424
        %2925 = vmatprep.subr.bf16.mxu0 %v2427
        %2926 = vmatpush1.bf16.msra.mxu0 %v2426
        %2927 = vmatprep.subr.bf16.mxu0 %v2429
        %2928 = vmatpush1.bf16.msra.mxu0 %v2428
        %2929 = vmatprep.subr.bf16.mxu0 %v2431
        %2930 = vmatpush1.bf16.msra.mxu0 %v2430
        %2931 = vmatprep.subr.bf16.mxu0 %v2433
        %2932 = vmatpush1.bf16.msra.mxu0 %v2432
        %2933 = vmatprep.subr.bf16.mxu0 %v2435
        %2934 = vmatpush1.bf16.msra.mxu0 %v2434
        %2935 = vmatprep.subr.bf16.mxu0 %v2437
        %2936 = vmatpush1.bf16.msra.mxu0 %v2436
        %2937 = vmatprep.subr.bf16.mxu0 %v2439
        %2938 = vmatpush1.bf16.msra.mxu0 %v2438
        %2939 = vmatprep.subr.bf16.mxu0 %v2441
        %2940 = vmatpush1.bf16.msra.mxu0 %v2440
        %2941 = vmatprep.subr.bf16.mxu0 %v2443
        %2942 = vmatpush1.bf16.msra.mxu0 %v2442
        %2943 = vmatprep.subr.bf16.mxu0 %v2445
        %2944 = vmatpush1.bf16.msra.mxu0 %v2444
        %2945 = vmatprep.subr.bf16.mxu0 %v2447
        %2946 = vmatpush1.bf16.msra.mxu0 %v2446
        %2947 = vmatprep.subr.bf16.mxu0 %v2449
        %2948 = vmatpush1.bf16.msra.mxu0 %v2448
        %2949 = vmatprep.mubr.bf16.mxu0 %v1741
        %2950 = vmatmul.mubr.bf16.gmra.mrb[0].mxu0 %v1740
        %v2951 = vpop.f32.mrb[0].mxu0
        %v2952 = vadd.f32 %v2839, %v2951
        %v2953 = vpop.f32.mrb[0].mxu0
        %v2954 = vadd.f32 %v2841, %v2953
        %v2955 = vpop.f32.mrb[0].mxu0
        %v2956 = vadd.f32 %v2843, %v2955
        %v2957 = vpop.f32.mrb[0].mxu0
        %v2958 = vadd.f32 %v2845, %v2957
        %2959 = vmatprep.mubr.bf16.mxu0 %v1749
        %2960 = vmatmul.mubr.bf16.gmra.mrb[0].mxu0 %v1748
        %v2961 = vpop.f32.mrb[0].mxu0
        %v2962 = vadd.f32 %v2849, %v2961
        %v2963 = vpop.f32.mrb[0].mxu0
        %v2964 = vadd.f32 %v2851, %v2963
        %v2965 = vpop.f32.mrb[0].mxu0
        %v2966 = vadd.f32 %v2853, %v2965
        %v2967 = vpop.f32.mrb[0].mxu0
        %v2968 = vadd.f32 %v2855, %v2967
        %2969 = vmatprep.mubr.bf16.mxu0 %v1757
        %2970 = vmatmul.mubr.bf16.gmra.mrb[0].mxu0 %v1756
        %v2971 = vpop.f32.mrb[0].mxu0
        %v2972 = vadd.f32 %v2859, %v2971
        %v2973 = vpop.f32.mrb[0].mxu0
        %v2974 = vadd.f32 %v2861, %v2973
        %v2975 = vpop.f32.mrb[0].mxu0
        %v2976 = vadd.f32 %v2863, %v2975
        %v2977 = vpop.f32.mrb[0].mxu0
        %v2978 = vadd.f32 %v2865, %v2977
        %2979 = vmatprep.mubr.bf16.mxu0 %v1765
        %2980 = vmatmul.mubr.bf16.gmra.mrb[0].mxu0 %v1764
        %v2981 = vpop.f32.mrb[0].mxu0
        %v2982 = vadd.f32 %v2869, %v2981
        %v2983 = vpop.f32.mrb[0].mxu0
        %v2984 = vadd.f32 %v2871, %v2983
        %v2985 = vpop.f32.mrb[0].mxu0
        %v2986 = vadd.f32 %v2873, %v2985
        %v2987 = vpop.f32.mrb[0].mxu0
        %v2988 = vadd.f32 %v2875, %v2987
        %2989 = vmatprep.mubr.bf16.mxu0 %v1773
        %2990 = vmatmul.mubr.bf16.gmra.mrb[0].mxu0 %v1772
        %v2991 = vpop.f32.mrb[0].mxu0
        %v2992 = vadd.f32 %v2879, %v2991
        %v2993 = vpop.f32.mrb[0].mxu0
        %v2994 = vadd.f32 %v2881, %v2993
        %v2995 = vpop.f32.mrb[0].mxu0
        %v2996 = vadd.f32 %v2883, %v2995
        %v2997 = vpop.f32.mrb[0].mxu0
        %v2998 = vadd.f32 %v2885, %v2997
        %2999 = vmatprep.mubr.bf16.mxu0 %v1781
        %3000 = vmatmul.mubr.bf16.gmra.mrb[0].mxu0 %v1780
        %v3001 = vpop.f32.mrb[0].mxu0
        %v3002 = vadd.f32 %v2889, %v3001
        %v3003 = vpop.f32.mrb[0].mxu0
        %v3004 = vadd.f32 %v2891, %v3003
        %v3005 = vpop.f32.mrb[0].mxu0
        %v3006 = vadd.f32 %v2893, %v3005
        %v3007 = vpop.f32.mrb[0].mxu0
        %v3008 = vadd.f32 %v2895, %v3007
        %3009 = vmatprep.mubr.bf16.mxu0 %v1789
        %3010 = vmatmul.mubr.bf16.gmra.mrb[0].mxu0 %v1788
        %v3011 = vpop.f32.mrb[0].mxu0
        %v3012 = vadd.f32 %v2899, %v3011
        %v3013 = vpop.f32.mrb[0].mxu0
        %v3014 = vadd.f32 %v2901, %v3013
        %v3015 = vpop.f32.mrb[0].mxu0
        %v3016 = vadd.f32 %v2903, %v3015
        %v3017 = vpop.f32.mrb[0].mxu0
        %v3018 = vadd.f32 %v2905, %v3017
        %3019 = vmatprep.mubr.bf16.mxu0 %v1797
        %3020 = vmatmul.mubr.bf16.gmra.mrb[0].mxu0 %v1796
        %v3021 = vpop.f32.mrb[0].mxu0
        %v3022 = vadd.f32 %v2909, %v3021
        %v3023 = vpop.f32.mrb[0].mxu0
        %v3024 = vadd.f32 %v2911, %v3023
        %v3025 = vpop.f32.mrb[0].mxu0
        %v3026 = vadd.f32 %v2913, %v3025
        %v3027 = vpop.f32.mrb[0].mxu0
        %v3028 = vadd.f32 %v2915, %v3027
        %3029 = vdwg.mxu0
        %3030 = vst [vmem:[%s246] sm:$0xff] %v2952
        %3031 = vst [vmem:[%s246 + $0x8] sm:$0xff] %v2954
        %3032 = vst [vmem:[%s246 + $0x10] sm:$0xff] %v2956
        %3033 = vst [vmem:[%s246 + $0x18] sm:$0xff] %v2958
        %3034 = vst [vmem:[%s246 + $0x20] sm:$0xff] %v2962
        %3035 = vst [vmem:[%s246 + $0x28] sm:$0xff] %v2964
        %3036 = vst [vmem:[%s246 + $0x30] sm:$0xff] %v2966
        %3037 = vst [vmem:[%s246 + $0x38] sm:$0xff] %v2968
        %3038 = vst [vmem:[%s246 + $0x40] sm:$0xff] %v2972
        %3039 = vst [vmem:[%s246 + $0x48] sm:$0xff] %v2974
        %3040 = vst [vmem:[%s246 + $0x50] sm:$0xff] %v2976
        %3041 = vst [vmem:[%s246 + $0x58] sm:$0xff] %v2978
        %3042 = vst [vmem:[%s246 + $0x60] sm:$0xff] %v2982
        %3043 = vst [vmem:[%s246 + $0x68] sm:$0xff] %v2984
        %3044 = vst [vmem:[%s246 + $0x70] sm:$0xff] %v2986
        %3045 = vst [vmem:[%s246 + $0x78] sm:$0xff] %v2988
        %3046 = vst [vmem:[%s246 + $0x80] sm:$0xff] %v2992
        %3047 = vst [vmem:[%s246 + $0x88] sm:$0xff] %v2994
        %3048 = vst [vmem:[%s246 + $0x90] sm:$0xff] %v2996
        %3049 = vst [vmem:[%s246 + $0x98] sm:$0xff] %v2998
        %3050 = vst [vmem:[%s246 + $0xa0] sm:$0xff] %v3002
        %3051 = vst [vmem:[%s246 + $0xa8] sm:$0xff] %v3004
        %3052 = vst [vmem:[%s246 + $0xb0] sm:$0xff] %v3006
        %3053 = vst [vmem:[%s246 + $0xb8] sm:$0xff] %v3008
        %3054 = vst [vmem:[%s246 + $0xc0] sm:$0xff] %v3012
        %3055 = vst [vmem:[%s246 + $0xc8] sm:$0xff] %v3014
        %3056 = vst [vmem:[%s246 + $0xd0] sm:$0xff] %v3016
        %3057 = vst [vmem:[%s246 + $0xd8] sm:$0xff] %v3018
        %3058 = vst [vmem:[%s246 + $0xe0] sm:$0xff] %v3022
        %3059 = vst [vmem:[%s246 + $0xe8] sm:$0xff] %v3024
        %3060 = vst [vmem:[%s246 + $0xf0] sm:$0xff] %v3026
        %3061 = vst [vmem:[%s246 + $0xf8] sm:$0xff] %v3028
        %s3062 = smul.u32 16, %s17
        %p3063 = scmp.lt.s32.totalorder %s3062, 31
        %s3064 = scalar_select %p3063, %s3062, 31
        %s3065 = smul.addr %s3064, 2
        %s3066 = smul.addr %s3065, 8
        %s3067 = scalar_lea.vmem %s5, %s3066
        // Predicated region
        $region45: #{feed_forward.1} parent=39 // pred_check
          %p3068 = pneg %p145
        $region46: #{feed_forward.1} parent=39 // pred_check_branch
          %3070 = sbr.rel (%p3068) target = $region48
        $region47: #{feed_forward.1} parent=39 // pred_region
          %s3071 = smul.u32 16, %s17
        $region48: #{feed_forward.1} parent=39 // pred_fallthru
          _
      $region40: #{feed_forward.1} parent=5 // pred_fallthru
        _
      %p3072 = scmp.le.s32.totalorder 2, %s12
      // Predicated region
      $region49: #{feed_forward.1} parent=5 // pred_check
        %p3073 = pneg %p3072
      $region50: #{feed_forward.1} parent=5 // pred_check_branch
        %3075 = sbr.rel (%p3073) target = $region52
      $region51: #{feed_forward.1} parent=5 // pred_region
        %s3076 = ssub.s32 %s12, 2
        // Predicated region
        $region53: #{feed_forward.1} parent=51 // pred_check
          %p3077 = pneg %p151
        $region54: #{feed_forward.1} parent=51 // pred_check_branch
          %3079 = sbr.rel (%p3077) target = $region56
        $region55: #{feed_forward.1} parent=51 // pred_region
          %s3080 = smul.u32 16, %s18
          %p3081 = scmp.lt.s32.totalorder %s3080, 31
          %s3082 = scalar_select %p3081, %s3080, 31
          %s3083 = smul.addr %s3082, 2
          %s3084 = smul.addr %s3083, 8
          %s3085 = scalar_lea.vmem %s5, %s3084
        $region56: #{feed_forward.1} parent=51 // pred_fallthru
          _
      $region52: #{feed_forward.1} parent=5 // pred_fallthru
        _
    $region6: #{feed_forward.1} parent=1 // loop_footer
      %s16 = sadd.s32 1, %s12
    $region7: #{feed_forward.1} parent=1 // loop_footer_branch
      %11 = sbr.rel target = $region3
    $region8: #{feed_forward.1} parent=1 // loop_exit
      _
    %3086 = vsyncpa [#allocation3], 1
    %s3087 = scalar_lea.sflag [#allocation3], 1
    %3088 = vsyncpa %s3087, 1

</llo_original>
